<compile_context>
chip_gen: v5e
topology: v5e:2x2
jax: 0.10.0
libtpu: 0.0.40
codegen_flags: <defaults>
</compile_context>

<pallas_src>
import functools
import math

import numpy as np

import jax
import jax.numpy as jnp
from jax.experimental import pallas as pl
from jax.experimental.pallas import tpu as pltpu

NEG_SLOPE = 0.2
ACT_GAIN = math.sqrt(2.0)                       # FusedLeakyReLU output gain
_BLUR = np.array([1.0, 3.0, 3.0, 1.0], np.float32)
BLUR_1D = _BLUR / _BLUR.sum()                   # [1,3,3,1]/8; outer() -> /64


def _flrelu(v):
    """FusedLeakyReLU (bias already added): leaky(0.2) then * sqrt(2)."""
    return jnp.where(v >= 0.0, v, NEG_SLOPE * v) * ACT_GAIN


# ---------------------------------------------------------------------------
# Fused SkipBlock kernel.  One grid step = Nb images packed along the rows
# (sublane) axis in the packed layout feat[n*H + h, w*C + c], so every matmul
# is lane-dense on the output and batch rides the MXU M dimension.
# ---------------------------------------------------------------------------
def _skip_block_kernel(*refs, has_features, H, Ho):
    if has_features:
        (x_ref, fin_ref, a0_ref, b0_ref, a1_ref, b1_ref,
         esel_ref, osel_ref, w2_ref, b2_ref, srow_ref, dcol_ref,
         feat_ref, xds_ref) = refs
    else:
        (x_ref, a0_ref, b0_ref, a1_ref, b1_ref,
         esel_ref, osel_ref, w2_ref, b2_ref, srow_ref, dcol_ref,
         feat_ref, xds_ref) = refs
        fin_ref = None

    f32, bf16 = jnp.float32, jnp.bfloat16
    x = x_ref[...]                                               # (Nb*H, W*3) bf16

    # --- from_rgb: 1x1 EqualConv2d + FusedLeakyReLU (+ skip connection). ---
    f0 = jnp.dot(x, a0_ref[...], preferred_element_type=f32)     # (Nb*H, W*Cin)
    f0 = _flrelu(f0 + b0_ref[...])
    if has_features:
        f0 = f0 + fin_ref[...].astype(f32)

    nbh, wc = f0.shape
    row = jax.lax.broadcasted_iota(jnp.int32, (nbh, wc), 0) % H  # row within image

    # --- conv1 (3x3, pad=1): row taps via sublane rolls (+ per-image boundary
    #     masks); column taps + zero pad live in the stacked (3*W*Cin, W*Cin)
    #     operand -> ONE MXU matmul with K = 3*W*Cin. ---
    up = jnp.where(row == 0, 0.0, pltpu.roll(f0, 1, 0))          # f0[h-1]
    dn = jnp.where(row == H - 1, 0.0, pltpu.roll(f0, nbh - 1, 0))  # f0[h+1]
    cat1 = jnp.concatenate([up, f0, dn], axis=1).astype(bf16)    # (Nb*H, 3*W*Cin)
    f1 = _flrelu(jnp.dot(cat1, a1_ref[...], preferred_element_type=f32)
                 + b1_ref[...])                                  # (Nb*H, W*Cin)
    f1b = f1.astype(bf16)

    # --- conv2: Blur(pad=2) folded into the 3x3 stride-2 conv -> effective
    #     6x6 stride-2 kernel.  Split rows into even/odd phases (exact 0/1
    #     selection matmuls), shift the phases by +-1 output row via rolls,
    #     stack the 6 row taps along K -> ONE matmul with K = 6*W*Cin. ---
    ev = jnp.dot(esel_ref[...], f1b, preferred_element_type=f32)  # f1[2p]
    od = jnp.dot(osel_ref[...], f1b, preferred_element_type=f32)  # f1[2p+1]
    nbo = ev.shape[0]
    prow = jax.lax.broadcasted_iota(jnp.int32, (nbo, wc), 0) % Ho
    top = prow == 0
    bot = prow == Ho - 1
    em = jnp.where(top, 0.0, pltpu.roll(ev, 1, 0))               # f1[2p-2]
    om = jnp.where(top, 0.0, pltpu.roll(od, 1, 0))               # f1[2p-1]
    ep = jnp.where(bot, 0.0, pltpu.roll(ev, nbo - 1, 0))         # f1[2p+2]
    op = jnp.where(bot, 0.0, pltpu.roll(od, nbo - 1, 0))         # f1[2p+3]
    cat2 = jnp.concatenate([em, om, ev, od, ep, op], axis=1).astype(bf16)
    f2 = jnp.dot(cat2, w2_ref[...], preferred_element_type=f32)  # (Nb*Ho, Wo*Cout)
    feat_ref[...] = _flrelu(f2 + b2_ref[...]).astype(feat_ref.dtype)

    # --- downsample(input): separable [1,3,3,1] blur + stride-2 decimation as
    #     two matmuls; the horizontal operand is zero-padded to a 128-lane
    #     output slab so the store is lane-dense. ---
    xr = jnp.dot(srow_ref[...], x, preferred_element_type=f32).astype(bf16)
    xds = jnp.dot(xr, dcol_ref[...], preferred_element_type=f32)
    xds_ref[...] = xds.astype(xds_ref.dtype)


# ---------------------------------------------------------------------------
# Host-side (trace-time) restructuring of the weights into matmul operands.
# Depends only on weights / static shapes; in a real model this is cached per
# weight update, not rebuilt per forward call.
# ---------------------------------------------------------------------------
def _build_skip_block_operands(params, H, W, Nb):
    Cin = params["w_rgb"].shape[0]
    Cout = params["w2"].shape[0]
    Ho, Wo = H // 2, W // 2
    f32 = jnp.float32
    bf16 = jnp.bfloat16
    k1 = BLUR_1D

    s_rgb = 1.0 / math.sqrt(3.0)                 # EqualConv2d scale, fan_in=3
    s_3x3 = 1.0 / math.sqrt(Cin * 9.0)           # fan_in = Cin*9

    # from_rgb (1x1): packed block-diagonal matrix (W*3, W*Cin).
    w0 = jnp.transpose(params["w_rgb"][:, :, 0, 0], (1, 0)) * s_rgb       # (3, Cin)
    a0 = jnp.kron(jnp.eye(W, dtype=f32), w0)

    # conv1 (3x3, pad=1): column taps + zero pad per row-tap ky, stacked along
    # K in the order [ky=0 (h-1), ky=1 (h), ky=2 (h+1)] to match the kernel.
    w1 = jnp.transpose(params["w1"], (2, 3, 1, 0)) * s_3x3                # (ky,kx,ci,co)
    a1 = jnp.concatenate([
        sum(jnp.kron(jnp.eye(W, k=-(kx - 1), dtype=f32), w1[ky, kx]) for kx in range(3))
        for ky in range(3)], axis=0)                                      # (3*W*Cin, W*Cin)

    # conv2: fold Blur([1,3,3,1], pad=(2,2)) into the 3x3 stride-2 weights ->
    # effective 6x6 kernel (kept in f32, single bf16 cast at the end).
    w2 = jnp.transpose(params["w2"], (2, 3, 1, 0)) * s_3x3                # (u,v,ci,co)
    k2 = jnp.asarray(np.outer(k1, k1), f32)                               # (4,4), sums to 1
    w_eff = jnp.zeros((6, 6, Cin, Cout), f32)
    for u in range(3):
        for v in range(3):
            w_eff = w_eff.at[u:u + 4, v:v + 4].add(
                k2[:, :, None, None] * w2[u, v][None, None])

    # Column decimation (stride 2) + taps + zero padding, per row-tap s,
    # stacked along K in the order s=0..5 (input row 2p+s-2).
    sel_c = np.zeros((6, W, Wo), np.float32)
    for t in range(6):
        for q in range(Wo):
            c = 2 * q + t - 2
            if 0 <= c < W:
                sel_c[t, c, q] = 1.0
    w2s = jnp.concatenate([
        sum(jnp.kron(jnp.asarray(sel_c[t]), w_eff[s, t]) for t in range(6))
        for s in range(6)], axis=0)                                       # (6*W*Cin, Wo*Cout)

    # Even/odd row-phase selection for the conv2 stride-2 decimation,
    # block-diagonal over the Nb images packed into one block.
    e_img = np.zeros((Ho, H), np.float32)
    o_img = np.zeros((Ho, H), np.float32)
    for p in range(Ho):
        e_img[p, 2 * p] = 1.0
        o_img[p, 2 * p + 1] = 1.0
    eye_nb = np.eye(Nb, dtype=np.float32)
    esel = np.kron(eye_nb, e_img)                                         # (Nb*Ho, Nb*H)
    osel = np.kron(eye_nb, o_img)

    # Downsample path: separable blur + stride-2 decimation, padding folded in.
    srow_img = np.zeros((Ho, H), np.float32)                              # vertical taps
    for p in range(Ho):
        for a in range(4):
            r = 2 * p + a - 1
            if 0 <= r < H:
                srow_img[p, r] = k1[a]
    srow = np.kron(eye_nb, srow_img)                                      # (Nb*Ho, Nb*H)

    xds_w = ((Wo * 3 + 127) // 128) * 128        # lane-dense (>=128) output width
    dcol = np.zeros((W * 3, xds_w), np.float32)                           # horizontal taps
    for q in range(Wo):
        for b in range(4):
            c = 2 * q + b - 1
            if 0 <= c < W:
                for ch in range(3):
                    dcol[c * 3 + ch, q * 3 + ch] = k1[b]

    # Packed (per-pixel tiled) FusedLeakyReLU biases (kept f32; added to the
    # f32 accumulators before activation).
    b0 = jnp.tile(params["b_rgb"], W).reshape(1, W * Cin).astype(f32)
    b1 = jnp.tile(params["b1"], W).reshape(1, W * Cin).astype(f32)
    b2 = jnp.tile(params["b2"], Wo).reshape(1, Wo * Cout).astype(f32)

    def bf(v):
        return jnp.asarray(v).astype(bf16)

    ops = {
        "a0": bf(a0), "b0": b0, "a1": bf(a1), "b1": b1,
        "esel": bf(esel), "osel": bf(osel), "w2": bf(w2s), "b2": b2,
        "srow": bf(srow), "dcol": bf(dcol),
    }
    return ops, xds_w


def _pick_batch_tile(N, H):
    """Largest divisor of N whose packed block (Nb*H rows) stays <= 256 rows."""
    cap = max(1, 256 // H)
    nb = 1
    for d in range(1, N + 1):
        if N % d == 0 and d <= cap:
            nb = d
    return nb


# ---------------------------------------------------------------------------
# SkipBlock parameters + forward
# ---------------------------------------------------------------------------
def init_skip_block_params(key, in_channel, out_channel):
    """Deterministic synthetic params; shapes match the PyTorch module (OIHW)."""
    ks = jax.random.split(key, 6)
    return {
        "w_rgb": jax.random.normal(ks[0], (in_channel, 3, 1, 1), jnp.float32),
        "b_rgb": 0.1 * jax.random.normal(ks[1], (in_channel,), jnp.float32),
        "w1": jax.random.normal(ks[2], (in_channel, in_channel, 3, 3), jnp.float32),
        "b1": 0.1 * jax.random.normal(ks[3], (in_channel,), jnp.float32),
        "w2": jax.random.normal(ks[4], (out_channel, in_channel, 3, 3), jnp.float32),
        "b2": 0.1 * jax.random.normal(ks[5], (out_channel,), jnp.float32),
    }


def skip_block_forward(x_nchw, params, features_nchw=None):
    """Pallas SkipBlock forward.  Inputs/outputs are NCHW (PyTorch convention)."""
    N, _, H, W = x_nchw.shape
    assert H % 2 == 0 and W % 2 == 0, "SkipBlock expects even spatial dims"
    Cin = params["w_rgb"].shape[0]
    Cout = params["w2"].shape[0]
    Ho, Wo = H // 2, W // 2

    Nb = _pick_batch_tile(N, H)                  # images folded into matmul M
    ops, xds_w = _build_skip_block_operands(params, H, W, Nb)

    bf16 = jnp.bfloat16
    # NCHW -> packed (N*H, W*C) bf16 (channels minor on lanes, batch on rows).
    x_p = jnp.transpose(x_nchw, (0, 2, 3, 1)).reshape(N * H, W * 3).astype(bf16)

    has_features = features_nchw is not None
    inputs = [x_p]
    in_specs = [pl.BlockSpec((Nb * H, W * 3), lambda i: (i, 0))]
    if has_features:
        f_p = jnp.transpose(features_nchw, (0, 2, 3, 1)).reshape(N * H, W * Cin)
        inputs.append(f_p.astype(bf16))
        in_specs.append(pl.BlockSpec((Nb * H, W * Cin), lambda i: (i, 0)))
    # Constant operands: fixed block index -> Pallas does not re-fetch them
    # across grid steps.
    for name in ("a0", "b0", "a1", "b1", "esel", "osel", "w2", "b2", "srow", "dcol"):
        arr = ops[name]
        inputs.append(arr)
        in_specs.append(pl.BlockSpec(arr.shape, lambda i: (0, 0)))

    out_dtype = x_nchw.dtype
    out_shape = (
        jax.ShapeDtypeStruct((N * Ho, Wo * Cout), out_dtype),   # features (packed)
        jax.ShapeDtypeStruct((N * Ho, xds_w), out_dtype),       # downsampled x (padded lanes)
    )
    out_specs = (
        pl.BlockSpec((Nb * Ho, Wo * Cout), lambda i: (i, 0)),
        pl.BlockSpec((Nb * Ho, xds_w), lambda i: (i, 0)),
    )

    grid = (N // Nb,)
    # Advisory cost estimate for XLA's scheduler.
    flops_step = 2 * (Nb * H * (W * 3) * (W * Cin)               # from_rgb
                      + Nb * H * (3 * W * Cin) * (W * Cin)       # conv1
                      + 2 * Nb * Ho * (Nb * H) * (W * Cin)       # even/odd select
                      + Nb * Ho * (6 * W * Cin) * (Wo * Cout)    # conv2
                      + Nb * Ho * (Nb * H) * (W * 3)             # downsample rows
                      + Nb * Ho * (W * 3) * xds_w)               # downsample cols
    bytes_acc = int(sum(int(np.prod(a.shape)) * a.dtype.itemsize for a in inputs)
                    + (N * Ho * Wo * Cout + N * Ho * xds_w) * np.dtype(out_dtype).itemsize)

    feat_p, xds_p = pl.pallas_call(
        functools.partial(_skip_block_kernel, has_features=has_features, H=H, Ho=Ho),
        out_shape=out_shape,
        grid=grid,
        in_specs=in_specs,
        out_specs=out_specs,
        compiler_params=pltpu.CompilerParams(dimension_semantics=("parallel",)),
        cost_estimate=pl.CostEstimate(flops=flops_step * grid[0],
                                      transcendentals=0,
                                      bytes_accessed=bytes_acc),
    )(*inputs)

    feats = jnp.transpose(feat_p.reshape(N, Ho, Wo, Cout), (0, 3, 1, 2))
    x_ds = jnp.transpose(xds_p[:, :Wo * 3].reshape(N, Ho, Wo, 3), (0, 3, 1, 2))
    return x_ds, feats


# ---------------------------------------------------------------------------
# Pure-JAX (XLA) reference, NCHW like PyTorch
# ---------------------------------------------------------------------------
def _ref_eqconv(x, w, scale, stride, pad):
    return jax.lax.conv_general_dilated(
        x, w * scale, (stride, stride), ((pad, pad), (pad, pad)),
        dimension_numbers=("NCHW", "OIHW", "NCHW"),
        precision=jax.lax.Precision.HIGHEST)


def _ref_flrelu(x, b):
    x = x + b.reshape(1, -1, 1, 1)
    return jnp.where(x >= 0.0, x, NEG_SLOPE * x) * ACT_GAIN


def _ref_blur(x, pad, down):
    k = jnp.array([1.0, 3.0, 3.0, 1.0], jnp.float32)
    k = jnp.outer(k, k)
    k = k / jnp.sum(k)
    C = x.shape[1]
    kd = jnp.tile(k.reshape(1, 1, 4, 4), (C, 1, 1, 1))
    return jax.lax.conv_general_dilated(
        x, kd, (down, down), ((pad[0], pad[1]), (pad[0], pad[1])),
        dimension_numbers=("NCHW", "OIHW", "NCHW"),
        feature_group_count=C, precision=jax.lax.Precision.HIGHEST)


def skip_block_reference(x, params, features=None):
    in_channel = params["w_rgb"].shape[0]
    s_rgb = 1.0 / math.sqrt(3)
    s_3x3 = 1.0 / math.sqrt(in_channel * 9)
    out = _ref_flrelu(_ref_eqconv(x, params["w_rgb"], s_rgb, 1, 0), params["b_rgb"])
    feats = out if features is None else out + features
    feats = _ref_flrelu(_ref_eqconv(feats, params["w1"], s_3x3, 1, 1), params["b1"])
    fb = _ref_blur(feats, (2, 2), 1)
    feats = _ref_flrelu(_ref_eqconv(fb, params["w2"], s_3x3, 2, 0), params["b2"])
    x_ds = _ref_blur(x, (1, 1), 2)
    return x_ds, feats


# ---------------------------------------------------------------------------
if __name__ == "__main__":
    key = jax.random.PRNGKey(0)
    k_x, k_p, k_f = jax.random.split(key, 3)
    N, H = 2, 16
    in_channel, out_channel = 8, 16

    x = jax.random.normal(k_x, (N, 3, H, H), jnp.float32)   # RGB input, NCHW
    params = init_skip_block_params(k_p, in_channel, out_channel)

    fwd = jax.jit(skip_block_forward)
    x_ds, feats = fwd(x, params)
    jax.block_until_ready((x_ds, feats))

    assert x_ds.shape == (N, 3, H // 2, H // 2), x_ds.shape
    assert feats.shape == (N, out_channel, H // 2, H // 2), feats.shape

    # bf16 activations/operands (f32 accumulation) vs. an f32 HIGHEST-precision
    # reference -> loose-ish tolerances.
    x_ds_ref, feats_ref = skip_block_reference(x, params)
    assert jnp.allclose(x_ds, x_ds_ref, rtol=2e-2, atol=4e-2), \
        float(jnp.max(jnp.abs(x_ds - x_ds_ref)))
    assert jnp.allclose(feats, feats_ref, rtol=2e-2, atol=4e-2), \
        float(jnp.max(jnp.abs(feats - feats_ref)))

    # Also exercise the skip-connection path (features is not None).
    features = jax.random.normal(k_f, (N, in_channel, H, H), jnp.float32)
    x_ds2, feats2 = jax.jit(skip_block_forward)(x, params, features)
    jax.block_until_ready((x_ds2, feats2))
    x_ds2_ref, feats2_ref = skip_block_reference(x, params, features)
    assert jnp.allclose(x_ds2, x_ds2_ref, rtol=2e-2, atol=4e-2), \
        float(jnp.max(jnp.abs(x_ds2 - x_ds2_ref)))
    assert jnp.allclose(feats2, feats2_ref, rtol=2e-2, atol=4e-2), \
        float(jnp.max(jnp.abs(feats2 - feats2_ref)))

    print("KERNEL_OK")
</pallas_src>

<mosaic_0001>
module attributes {stable_mosaic.version = 11 : i64} {
  func.func @_skip_block_kernel(%arg0: i32, %arg1: memref<32x48xbf16, #tpu.memory_space<vmem>>, %arg2: memref<48x128xbf16, #tpu.memory_space<vmem>>, %arg3: memref<1x128xf32, #tpu.memory_space<vmem>>, %arg4: memref<384x128xbf16, #tpu.memory_space<vmem>>, %arg5: memref<1x128xf32, #tpu.memory_space<vmem>>, %arg6: memref<16x32xbf16, #tpu.memory_space<vmem>>, %arg7: memref<16x32xbf16, #tpu.memory_space<vmem>>, %arg8: memref<768x128xbf16, #tpu.memory_space<vmem>>, %arg9: memref<1x128xf32, #tpu.memory_space<vmem>>, %arg10: memref<16x32xbf16, #tpu.memory_space<vmem>>, %arg11: memref<48x128xbf16, #tpu.memory_space<vmem>>, %arg12: memref<16x128xf32, #tpu.memory_space<vmem>>, %arg13: memref<16x128xf32, #tpu.memory_space<vmem>>) attributes {dimension_semantics = [#tpu.dimension_semantics<parallel>], iteration_bounds = array<i64: 1>, scalar_prefetch = 0 : i64, scratch_operands = 0 : i64, tpu.core_type = #tpu.core_type<tc>, window_params = [{transform_indices = @transform_0, window_bounds = array<i64: 32, 48>}, {pipeline_mode = #tpu.pipeline_mode<synchronous>, transform_indices = @transform_1, window_bounds = array<i64: 48, 128>}, {pipeline_mode = #tpu.pipeline_mode<synchronous>, transform_indices = @transform_2, window_bounds = array<i64: 1, 128>}, {pipeline_mode = #tpu.pipeline_mode<synchronous>, transform_indices = @transform_3, window_bounds = array<i64: 384, 128>}, {pipeline_mode = #tpu.pipeline_mode<synchronous>, transform_indices = @transform_4, window_bounds = array<i64: 1, 128>}, {pipeline_mode = #tpu.pipeline_mode<synchronous>, transform_indices = @transform_5, window_bounds = array<i64: 16, 32>}, {pipeline_mode = #tpu.pipeline_mode<synchronous>, transform_indices = @transform_6, window_bounds = array<i64: 16, 32>}, {pipeline_mode = #tpu.pipeline_mode<synchronous>, transform_indices = @transform_7, window_bounds = array<i64: 768, 128>}, {pipeline_mode = #tpu.pipeline_mode<synchronous>, transform_indices = @transform_8, window_bounds = array<i64: 1, 128>}, {pipeline_mode = #tpu.pipeline_mode<synchronous>, transform_indices = @transform_9, window_bounds = array<i64: 16, 32>}, {pipeline_mode = #tpu.pipeline_mode<synchronous>, transform_indices = @transform_10, window_bounds = array<i64: 48, 128>}, {transform_indices = @transform_11, window_bounds = array<i64: 16, 128>}, {transform_indices = @transform_12, window_bounds = array<i64: 16, 128>}]} {
    %c0 = arith.constant 0 : index
    %c0_0 = arith.constant 0 : index
    %0 = vector.load %arg1[%c0, %c0_0] : memref<32x48xbf16, #tpu.memory_space<vmem>>, vector<32x48xbf16>
    %c0_1 = arith.constant 0 : index
    %c0_2 = arith.constant 0 : index
    %1 = vector.load %arg2[%c0_1, %c0_2] : memref<48x128xbf16, #tpu.memory_space<vmem>>, vector<48x128xbf16>
    %cst = arith.constant dense<0.000000e+00> : vector<32x128xf32>
    %2 = tpu.matmul %0, %1, %cst {dimension_numbers = #tpu.dot_dimension_numbers<[1], [0], [0], [1], [0, 0, 1, 1], [], []>} : vector<32x48xbf16>, vector<48x128xbf16>, vector<32x128xf32> -> vector<32x128xf32>
    %c0_3 = arith.constant 0 : index
    %c0_4 = arith.constant 0 : index
    %3 = vector.load %arg3[%c0_3, %c0_4] : memref<1x128xf32, #tpu.memory_space<vmem>>, vector<1x128xf32>
    %4 = vector.broadcast %3 : vector<1x128xf32> to vector<32x128xf32>
    %5 = arith.addf %2, %4 : vector<32x128xf32>
    %cst_5 = arith.constant 0.000000e+00 : f32
    %6 = vector.broadcast %cst_5 : f32 to vector<32x128xf32>
    %7 = arith.cmpf oge, %5, %6 : vector<32x128xf32>
    %cst_6 = arith.constant 2.000000e-01 : f32
    %8 = vector.broadcast %cst_6 : f32 to vector<32x128xf32>
    %9 = arith.mulf %8, %5 : vector<32x128xf32>
    %10 = arith.select %7, %5, %9 : vector<32x128xi1>, vector<32x128xf32>
    %cst_7 = arith.constant 1.41421354 : f32
    %11 = vector.broadcast %cst_7 : f32 to vector<32x128xf32>
    %12 = arith.mulf %10, %11 : vector<32x128xf32>
    %13 = tpu.iota {dimensions = array<i32: 0>} : vector<32x128xi32>
    %c16_i32 = arith.constant 16 : i32
    %c0_i32 = arith.constant 0 : i32
    %14 = arith.cmpi eq, %c16_i32, %c0_i32 : i32
    %c1_i32 = arith.constant 1 : i32
    %15 = arith.select %14, %c1_i32, %c16_i32 : i32
    %16 = vector.broadcast %15 : i32 to vector<32x128xi32>
    %17 = arith.remsi %13, %16 : vector<32x128xi32>
    %c0_i32_8 = arith.constant 0 : i32
    %18 = vector.broadcast %c0_i32_8 : i32 to vector<32x128xi32>
    %19 = arith.cmpi ne, %17, %18 : vector<32x128xi32>
    %c0_i32_9 = arith.constant 0 : i32
    %20 = vector.broadcast %c0_i32_9 : i32 to vector<32x128xi32>
    %21 = arith.cmpi slt, %17, %20 : vector<32x128xi32>
    %c0_i32_10 = arith.constant 0 : i32
    %22 = arith.cmpi slt, %15, %c0_i32_10 : i32
    %23 = vector.broadcast %22 : i1 to vector<32x128xi1>
    %24 = vector.broadcast %23 : vector<32x128xi1> to vector<32x128xi1>
    %25 = arith.xori %21, %24 : vector<32x128xi1>
    %26 = arith.andi %25, %19 : vector<32x128xi1>
    %27 = vector.broadcast %15 : i32 to vector<32x128xi32>
    %28 = arith.addi %17, %27 : vector<32x128xi32>
    %29 = arith.select %26, %28, %17 : vector<32x128xi1>, vector<32x128xi32>
    %c0_i32_11 = arith.constant 0 : i32
    %30 = vector.broadcast %c0_i32_11 : i32 to vector<32x128xi32>
    %31 = arith.cmpi eq, %29, %30 : vector<32x128xi32>
    %c1_i32_12 = arith.constant 1 : i32
    %32 = tpu.dynamic_rotate %12 by %c1_i32_12 dim 0 : vector<32x128xf32>, i32 -> vector<32x128xf32>
    %cst_13 = arith.constant 0.000000e+00 : f32
    %33 = vector.broadcast %cst_13 : f32 to vector<32x128xf32>
    %34 = arith.select %31, %33, %32 : vector<32x128xi1>, vector<32x128xf32>
    %c15_i32 = arith.constant 15 : i32
    %35 = vector.broadcast %c15_i32 : i32 to vector<32x128xi32>
    %36 = arith.cmpi eq, %29, %35 : vector<32x128xi32>
    %c31_i32 = arith.constant 31 : i32
    %37 = tpu.dynamic_rotate %12 by %c31_i32 dim 0 : vector<32x128xf32>, i32 -> vector<32x128xf32>
    %cst_14 = arith.constant 0.000000e+00 : f32
    %38 = vector.broadcast %cst_14 : f32 to vector<32x128xf32>
    %39 = arith.select %36, %38, %37 : vector<32x128xi1>, vector<32x128xf32>
    %40 = tpu.concatenate %34, %12, %39 in 1 : vector<32x128xf32>, vector<32x128xf32>, vector<32x128xf32> -> vector<32x384xf32>
    %41 = arith.truncf %40 : vector<32x384xf32> to vector<32x384xbf16>
    %c0_15 = arith.constant 0 : index
    %c0_16 = arith.constant 0 : index
    %42 = vector.load %arg4[%c0_15, %c0_16] : memref<384x128xbf16, #tpu.memory_space<vmem>>, vector<384x128xbf16>
    %cst_17 = arith.constant dense<0.000000e+00> : vector<32x128xf32>
    %43 = tpu.matmul %41, %42, %cst_17 {dimension_numbers = #tpu.dot_dimension_numbers<[1], [0], [0], [1], [0, 0, 1, 1], [], []>} : vector<32x384xbf16>, vector<384x128xbf16>, vector<32x128xf32> -> vector<32x128xf32>
    %c0_18 = arith.constant 0 : index
    %c0_19 = arith.constant 0 : index
    %44 = vector.load %arg5[%c0_18, %c0_19] : memref<1x128xf32, #tpu.memory_space<vmem>>, vector<1x128xf32>
    %45 = vector.broadcast %44 : vector<1x128xf32> to vector<32x128xf32>
    %46 = arith.addf %43, %45 : vector<32x128xf32>
    %cst_20 = arith.constant 0.000000e+00 : f32
    %47 = vector.broadcast %cst_20 : f32 to vector<32x128xf32>
    %48 = arith.cmpf oge, %46, %47 : vector<32x128xf32>
    %cst_21 = arith.constant 2.000000e-01 : f32
    %49 = vector.broadcast %cst_21 : f32 to vector<32x128xf32>
    %50 = arith.mulf %49, %46 : vector<32x128xf32>
    %51 = arith.select %48, %46, %50 : vector<32x128xi1>, vector<32x128xf32>
    %cst_22 = arith.constant 1.41421354 : f32
    %52 = vector.broadcast %cst_22 : f32 to vector<32x128xf32>
    %53 = arith.mulf %51, %52 : vector<32x128xf32>
    %54 = arith.truncf %53 : vector<32x128xf32> to vector<32x128xbf16>
    %c0_23 = arith.constant 0 : index
    %c0_24 = arith.constant 0 : index
    %55 = vector.load %arg6[%c0_23, %c0_24] : memref<16x32xbf16, #tpu.memory_space<vmem>>, vector<16x32xbf16>
    %cst_25 = arith.constant dense<0.000000e+00> : vector<16x128xf32>
    %56 = tpu.matmul %55, %54, %cst_25 {dimension_numbers = #tpu.dot_dimension_numbers<[1], [0], [0], [1], [0, 0, 1, 1], [], []>} : vector<16x32xbf16>, vector<32x128xbf16>, vector<16x128xf32> -> vector<16x128xf32>
    %c0_26 = arith.constant 0 : index
    %c0_27 = arith.constant 0 : index
    %57 = vector.load %arg7[%c0_26, %c0_27] : memref<16x32xbf16, #tpu.memory_space<vmem>>, vector<16x32xbf16>
    %cst_28 = arith.constant dense<0.000000e+00> : vector<16x128xf32>
    %58 = tpu.matmul %57, %54, %cst_28 {dimension_numbers = #tpu.dot_dimension_numbers<[1], [0], [0], [1], [0, 0, 1, 1], [], []>} : vector<16x32xbf16>, vector<32x128xbf16>, vector<16x128xf32> -> vector<16x128xf32>
    %59 = tpu.iota {dimensions = array<i32: 0>} : vector<16x128xi32>
    %c8_i32 = arith.constant 8 : i32
    %c0_i32_29 = arith.constant 0 : i32
    %60 = arith.cmpi eq, %c8_i32, %c0_i32_29 : i32
    %c1_i32_30 = arith.constant 1 : i32
    %61 = arith.select %60, %c1_i32_30, %c8_i32 : i32
    %62 = vector.broadcast %61 : i32 to vector<16x128xi32>
    %63 = arith.remsi %59, %62 : vector<16x128xi32>
    %c0_i32_31 = arith.constant 0 : i32
    %64 = vector.broadcast %c0_i32_31 : i32 to vector<16x128xi32>
    %65 = arith.cmpi ne, %63, %64 : vector<16x128xi32>
    %c0_i32_32 = arith.constant 0 : i32
    %66 = vector.broadcast %c0_i32_32 : i32 to vector<16x128xi32>
    %67 = arith.cmpi slt, %63, %66 : vector<16x128xi32>
    %c0_i32_33 = arith.constant 0 : i32
    %68 = arith.cmpi slt, %61, %c0_i32_33 : i32
    %69 = vector.broadcast %68 : i1 to vector<16x128xi1>
    %70 = vector.broadcast %69 : vector<16x128xi1> to vector<16x128xi1>
    %71 = arith.xori %67, %70 : vector<16x128xi1>
    %72 = arith.andi %71, %65 : vector<16x128xi1>
    %73 = vector.broadcast %61 : i32 to vector<16x128xi32>
    %74 = arith.addi %63, %73 : vector<16x128xi32>
    %75 = arith.select %72, %74, %63 : vector<16x128xi1>, vector<16x128xi32>
    %c0_i32_34 = arith.constant 0 : i32
    %76 = vector.broadcast %c0_i32_34 : i32 to vector<16x128xi32>
    %77 = arith.cmpi eq, %75, %76 : vector<16x128xi32>
    %c7_i32 = arith.constant 7 : i32
    %78 = vector.broadcast %c7_i32 : i32 to vector<16x128xi32>
    %79 = arith.cmpi eq, %75, %78 : vector<16x128xi32>
    %c1_i32_35 = arith.constant 1 : i32
    %80 = tpu.dynamic_rotate %56 by %c1_i32_35 dim 0 : vector<16x128xf32>, i32 -> vector<16x128xf32>
    %cst_36 = arith.constant 0.000000e+00 : f32
    %81 = vector.broadcast %cst_36 : f32 to vector<16x128xf32>
    %82 = arith.select %77, %81, %80 : vector<16x128xi1>, vector<16x128xf32>
    %c1_i32_37 = arith.constant 1 : i32
    %83 = tpu.dynamic_rotate %58 by %c1_i32_37 dim 0 : vector<16x128xf32>, i32 -> vector<16x128xf32>
    %cst_38 = arith.constant 0.000000e+00 : f32
    %84 = vector.broadcast %cst_38 : f32 to vector<16x128xf32>
    %85 = arith.select %77, %84, %83 : vector<16x128xi1>, vector<16x128xf32>
    %c15_i32_39 = arith.constant 15 : i32
    %86 = tpu.dynamic_rotate %56 by %c15_i32_39 dim 0 : vector<16x128xf32>, i32 -> vector<16x128xf32>
    %cst_40 = arith.constant 0.000000e+00 : f32
    %87 = vector.broadcast %cst_40 : f32 to vector<16x128xf32>
    %88 = arith.select %79, %87, %86 : vector<16x128xi1>, vector<16x128xf32>
    %c15_i32_41 = arith.constant 15 : i32
    %89 = tpu.dynamic_rotate %58 by %c15_i32_41 dim 0 : vector<16x128xf32>, i32 -> vector<16x128xf32>
    %cst_42 = arith.constant 0.000000e+00 : f32
    %90 = vector.broadcast %cst_42 : f32 to vector<16x128xf32>
    %91 = arith.select %79, %90, %89 : vector<16x128xi1>, vector<16x128xf32>
    %92 = tpu.concatenate %82, %85, %56, %58, %88, %91 in 1 : vector<16x128xf32>, vector<16x128xf32>, vector<16x128xf32>, vector<16x128xf32>, vector<16x128xf32>, vector<16x128xf32> -> vector<16x768xf32>
    %93 = arith.truncf %92 : vector<16x768xf32> to vector<16x768xbf16>
    %c0_43 = arith.constant 0 : index
    %c0_44 = arith.constant 0 : index
    %94 = vector.load %arg8[%c0_43, %c0_44] : memref<768x128xbf16, #tpu.memory_space<vmem>>, vector<768x128xbf16>
    %cst_45 = arith.constant dense<0.000000e+00> : vector<16x128xf32>
    %95 = tpu.matmul %93, %94, %cst_45 {dimension_numbers = #tpu.dot_dimension_numbers<[1], [0], [0], [1], [0, 0, 1, 1], [], []>} : vector<16x768xbf16>, vector<768x128xbf16>, vector<16x128xf32> -> vector<16x128xf32>
    %c0_46 = arith.constant 0 : index
    %c0_47 = arith.constant 0 : index
    %96 = vector.load %arg9[%c0_46, %c0_47] : memref<1x128xf32, #tpu.memory_space<vmem>>, vector<1x128xf32>
    %97 = vector.broadcast %96 : vector<1x128xf32> to vector<16x128xf32>
    %98 = arith.addf %95, %97 : vector<16x128xf32>
    %cst_48 = arith.constant 0.000000e+00 : f32
    %99 = vector.broadcast %cst_48 : f32 to vector<16x128xf32>
    %100 = arith.cmpf oge, %98, %99 : vector<16x128xf32>
    %cst_49 = arith.constant 2.000000e-01 : f32
    %101 = vector.broadcast %cst_49 : f32 to vector<16x128xf32>
    %102 = arith.mulf %101, %98 : vector<16x128xf32>
    %103 = arith.select %100, %98, %102 : vector<16x128xi1>, vector<16x128xf32>
    %cst_50 = arith.constant 1.41421354 : f32
    %104 = vector.broadcast %cst_50 : f32 to vector<16x128xf32>
    %105 = arith.mulf %103, %104 : vector<16x128xf32>
    %c0_51 = arith.constant 0 : index
    %c0_52 = arith.constant 0 : index
    %106 = vector.load %arg12[%c0_51, %c0_52] : memref<16x128xf32, #tpu.memory_space<vmem>>, vector<16x128xf32>
    tpu.vector_store %arg12[%c0_51, %c0_52], %105 {strides = array<i32>} : memref<16x128xf32, #tpu.memory_space<vmem>>, vector<16x128xf32>,
    %c0_53 = arith.constant 0 : index
    %c0_54 = arith.constant 0 : index
    %107 = vector.load %arg10[%c0_53, %c0_54] : memref<16x32xbf16, #tpu.memory_space<vmem>>, vector<16x32xbf16>
    %cst_55 = arith.constant dense<0.000000e+00> : vector<16x48xf32>
    %108 = tpu.matmul %107, %0, %cst_55 {dimension_numbers = #tpu.dot_dimension_numbers<[1], [0], [0], [1], [0, 0, 1, 1], [], []>} : vector<16x32xbf16>, vector<32x48xbf16>, vector<16x48xf32> -> vector<16x48xf32>
    %109 = arith.truncf %108 : vector<16x48xf32> to vector<16x48xbf16>
    %c0_56 = arith.constant 0 : index
    %c0_57 = arith.constant 0 : index
    %110 = vector.load %arg11[%c0_56, %c0_57] : memref<48x128xbf16, #tpu.memory_space<vmem>>, vector<48x128xbf16>
    %cst_58 = arith.constant dense<0.000000e+00> : vector<16x128xf32>
    %111 = tpu.matmul %109, %110, %cst_58 {dimension_numbers = #tpu.dot_dimension_numbers<[1], [0], [0], [1], [0, 0, 1, 1], [], []>} : vector<16x48xbf16>, vector<48x128xbf16>, vector<16x128xf32> -> vector<16x128xf32>
    %c0_59 = arith.constant 0 : index
    %c0_60 = arith.constant 0 : index
    %112 = vector.load %arg13[%c0_59, %c0_60] : memref<16x128xf32, #tpu.memory_space<vmem>>, vector<16x128xf32>
    tpu.vector_store %arg13[%c0_59, %c0_60], %111 {strides = array<i32>} : memref<16x128xf32, #tpu.memory_space<vmem>>, vector<16x128xf32>,
    return
  }
  func.func @transform_0(%arg0: i32) -> (i32, i32) {
    %c0_i32 = arith.constant 0 : i32
    %c0_i32_0 = arith.constant 0 : i32
    return %arg0, %c0_i32 : i32, i32
  }
  func.func @transform_1(%arg0: i32) -> (i32, i32) {
    %c0_i32 = arith.constant 0 : i32
    %c0_i32_0 = arith.constant 0 : i32
    %c0_i32_1 = arith.constant 0 : i32
    return %c0_i32, %c0_i32_0 : i32, i32
  }
  func.func @transform_2(%arg0: i32) -> (i32, i32) {
    %c0_i32 = arith.constant 0 : i32
    %c0_i32_0 = arith.constant 0 : i32
    %c0_i32_1 = arith.constant 0 : i32
    return %c0_i32, %c0_i32_0 : i32, i32
  }
  func.func @transform_3(%arg0: i32) -> (i32, i32) {
    %c0_i32 = arith.constant 0 : i32
    %c0_i32_0 = arith.constant 0 : i32
    %c0_i32_1 = arith.constant 0 : i32
    return %c0_i32, %c0_i32_0 : i32, i32
  }
  func.func @transform_4(%arg0: i32) -> (i32, i32) {
    %c0_i32 = arith.constant 0 : i32
    %c0_i32_0 = arith.constant 0 : i32
    %c0_i32_1 = arith.constant 0 : i32
    return %c0_i32, %c0_i32_0 : i32, i32
  }
  func.func @transform_5(%arg0: i32) -> (i32, i32) {
    %c0_i32 = arith.constant 0 : i32
    %c0_i32_0 = arith.constant 0 : i32
    %c0_i32_1 = arith.constant 0 : i32
    return %c0_i32, %c0_i32_0 : i32, i32
  }
  func.func @transform_6(%arg0: i32) -> (i32, i32) {
    %c0_i32 = arith.constant 0 : i32
    %c0_i32_0 = arith.constant 0 : i32
    %c0_i32_1 = arith.constant 0 : i32
    return %c0_i32, %c0_i32_0 : i32, i32
  }
  func.func @transform_7(%arg0: i32) -> (i32, i32) {
    %c0_i32 = arith.constant 0 : i32
    %c0_i32_0 = arith.constant 0 : i32
    %c0_i32_1 = arith.constant 0 : i32
    return %c0_i32, %c0_i32_0 : i32, i32
  }
  func.func @transform_8(%arg0: i32) -> (i32, i32) {
    %c0_i32 = arith.constant 0 : i32
    %c0_i32_0 = arith.constant 0 : i32
    %c0_i32_1 = arith.constant 0 : i32
    return %c0_i32, %c0_i32_0 : i32, i32
  }
  func.func @transform_9(%arg0: i32) -> (i32, i32) {
    %c0_i32 = arith.constant 0 : i32
    %c0_i32_0 = arith.constant 0 : i32
    %c0_i32_1 = arith.constant 0 : i32
    return %c0_i32, %c0_i32_0 : i32, i32
  }
  func.func @transform_10(%arg0: i32) -> (i32, i32) {
    %c0_i32 = arith.constant 0 : i32
    %c0_i32_0 = arith.constant 0 : i32
    %c0_i32_1 = arith.constant 0 : i32
    return %c0_i32, %c0_i32_0 : i32, i32
  }
  func.func @transform_11(%arg0: i32) -> (i32, i32) {
    %c0_i32 = arith.constant 0 : i32
    %c0_i32_0 = arith.constant 0 : i32
    return %arg0, %c0_i32 : i32, i32
  }
  func.func @transform_12(%arg0: i32) -> (i32, i32) {
    %c0_i32 = arith.constant 0 : i32
    %c0_i32_0 = arith.constant 0 : i32
    return %arg0, %c0_i32 : i32, i32
  }
}

</mosaic_0001>

<llo_original>
// kernel: tile.18
$region0: #{tile.18}
  #allocation0 [shape = 's32[1]{0}', space=sflag, size = 0x4, scoped, tag = 'scoped memory for tile.18']
  %s0 = inlined_call_operand.vmem [shape: f32[8], index: 0, kind: input, shape index: {}]
  %s1 = inlined_call_operand.vmem [shape: f32[16,8], index: 1, kind: output, shape index: {}]
  // Predicated region
  $region2: #{tile.18} parent=0 // pred_check
    _
  $region3: #{tile.18} parent=0 // pred_check_branch
    %3 = sbr.rel (0) target = $region5
  $region4: #{tile.18} parent=0 // pred_region
    _
  $region5: #{tile.18} parent=0 // pred_fallthru
    _
  %v4 = vld [vmem:[%s0] ss:$0 sm:$0xff]
  %5 = vst [vmem:[%s1] sm:$0xff] %v4
  %s6 = scalar_lea.vmem %s1, 8
  %7 = vst [vmem:[%s6] sm:$0xff] %v4

// kernel: tile.19
$region0: #{tile.19}
  %s0 = inlined_call_operand.vmem [shape: f32[16,8], index: 0, kind: input, shape index: {}]
  %s1 = inlined_call_operand.vmem [shape: f32[1,128], index: 1, kind: output, shape index: {}]
  $region1: #{tile.19} parent=0
    #allocation0 [shape = 'u8[4096]{0}', space=vmem, size = 0x1000, scoped, tag = 'scoped mem for output reshape']
    %v2 = vld [vmem:[%s0] sm:$0x1]
    %vm3 = vcmask 64512
    %4 = vst.msk [vmem:[#allocation0] sm:$0x1] %vm3, %v2
    %s5 = scalar_lea.vmem %s0, 15
    %v6 = vld [vmem:[%s5] sm:$0x1]
    %7 = vrot.lane.b32.xlu0 %v6, 120
    %v8 = vpop.permute.xlu0 %7
    %vm9 = vcmask 1048512
    %10 = vst.msk [vmem:[#allocation0] sm:$0x1] %vm9, %v8
    %s11 = scalar_lea.vmem %s0, 14
    %v12 = vld [vmem:[%s11] sm:$0x1]
    %13 = vrot.lane.b32.xlu0 %v12, 112
    %v14 = vpop.permute.xlu0 %13
    %vm15 = vcmask 982912
    %16 = vst.msk [vmem:[#allocation0] sm:$0x1] %vm15, %v14
    %s17 = scalar_lea.vmem %s0, 13
    %v18 = vld [vmem:[%s17] sm:$0x1]
    %19 = vrot.lane.b32.xlu0 %v18, 104
    %v20 = vpop.permute.xlu0 %19
    %vm21 = vcmask 917312
    %22 = vst.msk [vmem:[#allocation0] sm:$0x1] %vm21, %v20
    %s23 = scalar_lea.vmem %s0, 12
    %v24 = vld [vmem:[%s23] sm:$0x1]
    %25 = vrot.lane.b32.xlu0 %v24, 96
    %v26 = vpop.permute.xlu0 %25
    %vm27 = vcmask 851712
    %28 = vst.msk [vmem:[#allocation0] sm:$0x1] %vm27, %v26
    %s29 = scalar_lea.vmem %s0, 11
    %v30 = vld [vmem:[%s29] sm:$0x1]
    %31 = vrot.lane.b32.xlu0 %v30, 88
    %v32 = vpop.permute.xlu0 %31
    %vm33 = vcmask 786112
    %34 = vst.msk [vmem:[#allocation0] sm:$0x1] %vm33, %v32
    %s35 = scalar_lea.vmem %s0, 10
    %v36 = vld [vmem:[%s35] sm:$0x1]
    %37 = vrot.lane.b32.xlu0 %v36, 80
    %v38 = vpop.permute.xlu0 %37
    %vm39 = vcmask 720512
    %40 = vst.msk [vmem:[#allocation0] sm:$0x1] %vm39, %v38
    %s41 = scalar_lea.vmem %s0, 9
    %v42 = vld [vmem:[%s41] sm:$0x1]
    %43 = vrot.lane.b32.xlu0 %v42, 72
    %v44 = vpop.permute.xlu0 %43
    %vm45 = vcmask 654912
    %46 = vst.msk [vmem:[#allocation0] sm:$0x1] %vm45, %v44
    %s47 = scalar_lea.vmem %s0, 8
    %v48 = vld [vmem:[%s47] sm:$0x1]
    %49 = vrot.lane.b32.xlu0 %v48, 64
    %v50 = vpop.permute.xlu0 %49
    %vm51 = vcmask 589312
    %52 = vst.msk [vmem:[#allocation0] sm:$0x1] %vm51, %v50
    %s53 = scalar_lea.vmem %s0, 7
    %v54 = vld [vmem:[%s53] sm:$0x1]
    %55 = vrot.lane.b32.xlu0 %v54, 56
    %v56 = vpop.permute.xlu0 %55
    %vm57 = vcmask 523712
    %58 = vst.msk [vmem:[#allocation0] sm:$0x1] %vm57, %v56
    %s59 = scalar_lea.vmem %s0, 6
    %v60 = vld [vmem:[%s59] sm:$0x1]
    %61 = vrot.lane.b32.xlu0 %v60, 48
    %v62 = vpop.permute.xlu0 %61
    %vm63 = vcmask 458112
    %64 = vst.msk [vmem:[#allocation0] sm:$0x1] %vm63, %v62
    %s65 = scalar_lea.vmem %s0, 5
    %v66 = vld [vmem:[%s65] sm:$0x1]
    %67 = vrot.lane.b32.xlu0 %v66, 40
    %v68 = vpop.permute.xlu0 %67
    %vm69 = vcmask 392512
    %70 = vst.msk [vmem:[#allocation0] sm:$0x1] %vm69, %v68
    %s71 = scalar_lea.vmem %s0, 4
    %v72 = vld [vmem:[%s71] sm:$0x1]
    %73 = vrot.lane.b32.xlu0 %v72, 32
    %v74 = vpop.permute.xlu0 %73
    %vm75 = vcmask 326912
    %76 = vst.msk [vmem:[#allocation0] sm:$0x1] %vm75, %v74
    %s77 = scalar_lea.vmem %s0, 3
    %v78 = vld [vmem:[%s77] sm:$0x1]
    %79 = vrot.lane.b32.xlu0 %v78, 24
    %v80 = vpop.permute.xlu0 %79
    %vm81 = vcmask 261312
    %82 = vst.msk [vmem:[#allocation0] sm:$0x1] %vm81, %v80
    %s83 = scalar_lea.vmem %s0, 2
    %v84 = vld [vmem:[%s83] sm:$0x1]
    %85 = vrot.lane.b32.xlu0 %v84, 16
    %v86 = vpop.permute.xlu0 %85
    %vm87 = vcmask 195712
    %88 = vst.msk [vmem:[#allocation0] sm:$0x1] %vm87, %v86
    %s89 = scalar_lea.vmem %s0, 1
    %v90 = vld [vmem:[%s89] sm:$0x1]
    %91 = vrot.lane.b32.xlu0 %v90, 8
    %v92 = vpop.permute.xlu0 %91
    %vm93 = vcmask 130112
    %94 = vst.msk [vmem:[#allocation0] sm:$0x1] %vm93, %v92
    %s96 = ssub.s32 2, 1
    %v97 = vld [vmem:[#allocation0] sm:%s96]
    %s99 = ssub.s32 2, 1
    %100 = vst [vmem:[%s1] sm:%s99] %v97

// kernel: tile.28
$region0: #{tile.28}
  #allocation0 [shape = 's32[1]{0}', space=sflag, size = 0x4, scoped, tag = 'scoped memory for tile.28']
  %s0 = inlined_call_operand.vmem [shape: f32[16], index: 0, kind: input, shape index: {}]
  %s1 = inlined_call_operand.vmem [shape: f32[8,16], index: 1, kind: output, shape index: {}]
  // Predicated region
  $region2: #{tile.28} parent=0 // pred_check
    _
  $region3: #{tile.28} parent=0 // pred_check_branch
    %3 = sbr.rel (0) target = $region5
  $region4: #{tile.28} parent=0 // pred_region
    _
  $region5: #{tile.28} parent=0 // pred_fallthru
    _
  %v4 = vld [vmem:[%s0] ss:$0 sm:$0xff]
  %5 = vst [vmem:[%s1] sm:$0xff] %v4

// kernel: tile.29
$region0: #{tile.29}
  %s0 = inlined_call_operand.vmem [shape: f32[8,16], index: 0, kind: input, shape index: {}]
  %s1 = inlined_call_operand.vmem [shape: f32[1,128], index: 1, kind: output, shape index: {}]
  $region1: #{tile.29} parent=0
    #allocation0 [shape = 'u8[4096]{0}', space=vmem, size = 0x1000, scoped, tag = 'scoped mem for output reshape']
    %v2 = vld [vmem:[%s0] sm:$0x1]
    %vm3 = vcmask 130048
    %4 = vst.msk [vmem:[#allocation0] sm:$0x1] %vm3, %v2
    %s5 = scalar_lea.vmem %s0, 7
    %v6 = vld [vmem:[%s5] sm:$0x1]
    %7 = vrot.lane.b32.xlu0 %v6, 112
    %v8 = vpop.permute.xlu0 %7
    %vm9 = vcmask 1048448
    %10 = vst.msk [vmem:[#allocation0] sm:$0x1] %vm9, %v8
    %s11 = scalar_lea.vmem %s0, 6
    %v12 = vld [vmem:[%s11] sm:$0x1]
    %13 = vrot.lane.b32.xlu0 %v12, 96
    %v14 = vpop.permute.xlu0 %13
    %vm15 = vcmask 917248
    %16 = vst.msk [vmem:[#allocation0] sm:$0x1] %vm15, %v14
    %s17 = scalar_lea.vmem %s0, 5
    %v18 = vld [vmem:[%s17] sm:$0x1]
    %19 = vrot.lane.b32.xlu0 %v18, 80
    %v20 = vpop.permute.xlu0 %19
    %vm21 = vcmask 786048
    %22 = vst.msk [vmem:[#allocation0] sm:$0x1] %vm21, %v20
    %s23 = scalar_lea.vmem %s0, 4
    %v24 = vld [vmem:[%s23] sm:$0x1]
    %25 = vrot.lane.b32.xlu0 %v24, 64
    %v26 = vpop.permute.xlu0 %25
    %vm27 = vcmask 654848
    %28 = vst.msk [vmem:[#allocation0] sm:$0x1] %vm27, %v26
    %s29 = scalar_lea.vmem %s0, 3
    %v30 = vld [vmem:[%s29] sm:$0x1]
    %31 = vrot.lane.b32.xlu0 %v30, 48
    %v32 = vpop.permute.xlu0 %31
    %vm33 = vcmask 523648
    %34 = vst.msk [vmem:[#allocation0] sm:$0x1] %vm33, %v32
    %s35 = scalar_lea.vmem %s0, 2
    %v36 = vld [vmem:[%s35] sm:$0x1]
    %37 = vrot.lane.b32.xlu0 %v36, 32
    %v38 = vpop.permute.xlu0 %37
    %vm39 = vcmask 392448
    %40 = vst.msk [vmem:[#allocation0] sm:$0x1] %vm39, %v38
    %s41 = scalar_lea.vmem %s0, 1
    %v42 = vld [vmem:[%s41] sm:$0x1]
    %43 = vrot.lane.b32.xlu0 %v42, 16
    %v44 = vpop.permute.xlu0 %43
    %vm45 = vcmask 261248
    %46 = vst.msk [vmem:[#allocation0] sm:$0x1] %vm45, %v44
    %s48 = ssub.s32 2, 1
    %v49 = vld [vmem:[#allocation0] sm:%s48]
    %s51 = ssub.s32 2, 1
    %52 = vst [vmem:[%s1] sm:%s51] %v49

// kernel: skip_block_forward.1
$region0: #{skip_block_forward.1}
  #allocation0 [shape = 'u32[]', space=smem, size = 0x4, offset = 0x4, fixed_abs, tag = 'smem constant byte address 0x4 - core index']
  #allocation1 [shape = 'u32[72,128]{1,0:T(1,128)}', space=vmem, size = 0x9000, scoped, tag = 'internal scratch']
  %s0 = inlined_call_operand.vmem [shape: bf16[32,48], index: 0, kind: input, shape index: {}]
  %s1 = inlined_call_operand.vmem [shape: bf16[48,128], index: 1, kind: input, shape index: {}]
  %s2 = inlined_call_operand.vmem [shape: f32[1,128], index: 2, kind: input, shape index: {}]
  %s3 = inlined_call_operand.vmem [shape: bf16[384,128], index: 3, kind: input, shape index: {}]
  %s4 = inlined_call_operand.vmem [shape: f32[1,128], index: 4, kind: input, shape index: {}]
  %s5 = inlined_call_operand.vmem [shape: bf16[16,32], index: 5, kind: input, shape index: {}]
  %s6 = inlined_call_operand.vmem [shape: bf16[16,32], index: 6, kind: input, shape index: {}]
  %s7 = inlined_call_operand.vmem [shape: bf16[768,128], index: 7, kind: input, shape index: {}]
  %s8 = inlined_call_operand.vmem [shape: f32[1,128], index: 8, kind: input, shape index: {}]
  %s9 = inlined_call_operand.vmem [shape: bf16[16,32], index: 9, kind: input, shape index: {}]
  %s10 = inlined_call_operand.vmem [shape: bf16[48,128], index: 10, kind: input, shape index: {}]
  %s11 = inlined_call_operand.vmem [shape: f32[16,128], index: 11, kind: output, shape index: {0}]
  %s12 = inlined_call_operand.vmem [shape: f32[16,128], index: 12, kind: output, shape index: {1}]
  %13 = xla_tuple %s11, %s12
  %s14 = sld [smem:[#allocation0]]
  $region62: #{skip_block_forward.1} parent=0
    _
  %s16 = ssub.s32 1, %s14
  %s17 = scalar_select 0, %s16, %s14
  // Predicated region
  $region2: #{skip_block_forward.1} parent=0 // pred_check
    _
  $region3: #{skip_block_forward.1} parent=0 // pred_check_branch
    %19 = sbr.rel (0) target = $region5
  $region4: #{skip_block_forward.1} parent=0 // pred_region
    _
  $region5: #{skip_block_forward.1} parent=0 // pred_fallthru
    _
  // Predicated region
  $region6: #{skip_block_forward.1} parent=0 // pred_check
    _
  $region7: #{skip_block_forward.1} parent=0 // pred_check_branch
    %21 = sbr.rel (0) target = $region9
  $region8: #{skip_block_forward.1} parent=0 // pred_region
    _
  $region9: #{skip_block_forward.1} parent=0 // pred_fallthru
    _
  // Predicated region
  $region10: #{skip_block_forward.1} parent=0 // pred_check
    _
  $region11: #{skip_block_forward.1} parent=0 // pred_check_branch
    %23 = sbr.rel (0) target = $region13
  $region12: #{skip_block_forward.1} parent=0 // pred_region
    _
  $region13: #{skip_block_forward.1} parent=0 // pred_fallthru
    _
  // Predicated region
  $region14: #{skip_block_forward.1} parent=0 // pred_check
    _
  $region15: #{skip_block_forward.1} parent=0 // pred_check_branch
    %25 = sbr.rel (0) target = $region17
  $region16: #{skip_block_forward.1} parent=0 // pred_region
    _
  $region17: #{skip_block_forward.1} parent=0 // pred_fallthru
    _
  // Predicated region
  $region18: #{skip_block_forward.1} parent=0 // pred_check
    _
  $region19: #{skip_block_forward.1} parent=0 // pred_check_branch
    %27 = sbr.rel (0) target = $region21
  $region20: #{skip_block_forward.1} parent=0 // pred_region
    _
  $region21: #{skip_block_forward.1} parent=0 // pred_fallthru
    _
  // Predicated region
  $region22: #{skip_block_forward.1} parent=0 // pred_check
    _
  $region23: #{skip_block_forward.1} parent=0 // pred_check_branch
    %29 = sbr.rel (0) target = $region25
  $region24: #{skip_block_forward.1} parent=0 // pred_region
    _
  $region25: #{skip_block_forward.1} parent=0 // pred_fallthru
    _
  // Predicated region
  $region26: #{skip_block_forward.1} parent=0 // pred_check
    _
  $region27: #{skip_block_forward.1} parent=0 // pred_check_branch
    %31 = sbr.rel (0) target = $region29
  $region28: #{skip_block_forward.1} parent=0 // pred_region
    _
  $region29: #{skip_block_forward.1} parent=0 // pred_fallthru
    _
  // Predicated region
  $region30: #{skip_block_forward.1} parent=0 // pred_check
    _
  $region31: #{skip_block_forward.1} parent=0 // pred_check_branch
    %33 = sbr.rel (0) target = $region33
  $region32: #{skip_block_forward.1} parent=0 // pred_region
    _
  $region33: #{skip_block_forward.1} parent=0 // pred_fallthru
    _
  // Predicated region
  $region34: #{skip_block_forward.1} parent=0 // pred_check
    _
  $region35: #{skip_block_forward.1} parent=0 // pred_check_branch
    %35 = sbr.rel (0) target = $region37
  $region36: #{skip_block_forward.1} parent=0 // pred_region
    _
  $region37: #{skip_block_forward.1} parent=0 // pred_fallthru
    _
  // Predicated region
  $region38: #{skip_block_forward.1} parent=0 // pred_check
    _
  $region39: #{skip_block_forward.1} parent=0 // pred_check_branch
    %37 = sbr.rel (0) target = $region41
  $region40: #{skip_block_forward.1} parent=0 // pred_region
    _
  $region41: #{skip_block_forward.1} parent=0 // pred_fallthru
    _
  // Predicated region
  $region42: #{skip_block_forward.1} parent=0 // pred_check
    _
  $region43: #{skip_block_forward.1} parent=0 // pred_check_branch
    %39 = sbr.rel (0) target = $region45
  $region44: #{skip_block_forward.1} parent=0 // pred_region
    _
  $region45: #{skip_block_forward.1} parent=0 // pred_fallthru
    _
  %v41 = vld [vmem:[%s0] sm:$0xf]
  %v42 = vld [vmem:[%s0 + $0x4] sm:$0xf]
  %v43 = vld [vmem:[%s0 + $0x8] sm:$0xf]
  %v44 = vld [vmem:[%s0 + $0xc] sm:$0xf]
  %v45 = vld [vmem:[%s1] sm:$0xf]
  %v46 = vld [vmem:[%s1 + $0x4] sm:$0xf]
  %v47 = vld [vmem:[%s1 + $0x8] sm:$0xf]
  %v48 = vld [vmem:[%s1 + $0xc] sm:$0xf]
  %v49 = vld [vmem:[%s1 + $0x10] sm:$0xf]
  %v50 = vld [vmem:[%s1 + $0x14] sm:$0xf]
  %v51 = vld [vmem:[%s2] sm:$0x1]
  %v53 = vperm.slane %v51, 0
  %v59 = vunpack.c.l.b16 %v41
  %v60 = vunpack.c.l.b16 %v42
  %v61 = vunpack.c.l.b16 %v43
  %v62 = vunpack.c.l.b16 %v44
  %v63 = vpack.c.b16 %v60, %v59
  %v64 = vpack.c.b16 %v62, %v61
  %v71 = vunpack.c.l.b16 %v45
  %v72 = vunpack.c.l.b16 %v46
  %v73 = vunpack.c.l.b16 %v47
  %v74 = vunpack.c.l.b16 %v48
  %v75 = vunpack.c.l.b16 %v49
  %v76 = vunpack.c.l.b16 %v50
  %v77 = vpack.c.b16 %v72, %v71
  %v78 = vpack.c.b16 %v74, %v73
  %v79 = vpack.c.b16 %v76, %v75
  %vm83 = vcmask 392192
  %v85 = vsel %vm83, %v63, 0
  %v88 = vsel %vm83, %v64, 0
  %90 = vmatpush.bf16.msra.mxu0 0
  %91 = vmatpush.bf16.msra.mxu0 0
  %92 = vmatpush.bf16.msra.mxu0 0
  %93 = vmatpush.bf16.msra.mxu0 0
  %94 = vmatpush.bf16.msra.mxu0 0
  %95 = vmatpush.bf16.msra.mxu0 %v79
  %96 = vmatpush.bf16.msra.mxu0 %v78
  %97 = vmatpush.bf16.msra.mxu0 %v77
  %98 = vmatmul.bf16.gmra.mxu0 %v85
  %v99 = vpop.f32.mrf.mxu0
  %v100 = vadd.f32 %v53, %v99
  %v101 = vpop.f32.mrf.mxu0
  %v102 = vadd.f32 %v53, %v101
  %103 = vmatmul.bf16.gmra.mxu0 %v88
  %v104 = vpop.f32.mrf.mxu0
  %v105 = vadd.f32 %v53, %v104
  %v106 = vpop.f32.mrf.mxu0
  %v107 = vadd.f32 %v53, %v106
  %108 = vdwg.mxu0
  %vm109 = vcmp.ge.f32.partialorder %v100, 0.0
  %vm110 = vcmp.ge.f32.partialorder %v102, 0.0
  %vm111 = vcmp.ge.f32.partialorder %v105, 0.0
  %vm112 = vcmp.ge.f32.partialorder %v107, 0.0
  %v113 = vmul.f32 %v100, 0.2
  %v114 = vmul.f32 %v102, 0.2
  %v115 = vmul.f32 %v105, 0.2
  %v116 = vmul.f32 %v107, 0.2
  %v117 = vsel %vm109, %v100, %v113
  %v118 = vsel %vm110, %v102, %v114
  %v119 = vsel %vm111, %v105, %v115
  %v120 = vsel %vm112, %v107, %v116
  %v121 = vmul.f32 %v117, 1.4142135
  %v122 = vmul.f32 %v118, 1.4142135
  %v123 = vmul.f32 %v119, 1.4142135
  %v124 = vmul.f32 %v120, 1.4142135
  %v125 = vlaneseq
  %v126 = vshrl.u32 %v125, 7
  %v127 = vadd.s32 %v126, 8
  %v128 = vadd.s32 %v126, 16
  %v129 = vadd.s32 %v126, 24
  %vm130 = vcmp.lt.s32.totalorder %v126, 0
  %v131 = vsub.s32 0, %v126
  %v132 = vsel %vm130, %v131, %v126
  %v133 = vshrl.u32 %v132, 4
  %v134 = vand.u32 %v132, 15
  %v135 = vsub.s32 0, %v134
  %v136 = vsel %vm130, %v135, %v134
  %vm137 = vcmp.lt.s32.totalorder %v127, 0
  %v138 = vsub.s32 0, %v127
  %v139 = vsel %vm137, %v138, %v127
  %v140 = vshrl.u32 %v139, 4
  %v141 = vand.u32 %v139, 15
  %v142 = vsub.s32 0, %v141
  %v143 = vsel %vm137, %v142, %v141
  %vm144 = vcmp.lt.s32.totalorder %v128, 0
  %v145 = vsub.s32 0, %v128
  %v146 = vsel %vm144, %v145, %v128
  %v147 = vshrl.u32 %v146, 4
  %v148 = vand.u32 %v146, 15
  %v149 = vsub.s32 0, %v148
  %v150 = vsel %vm144, %v149, %v148
  %vm151 = vcmp.lt.s32.totalorder %v129, 0
  %v152 = vsub.s32 0, %v129
  %v153 = vsel %vm151, %v152, %v129
  %v154 = vshrl.u32 %v153, 4
  %v155 = vand.u32 %v153, 15
  %v156 = vsub.s32 0, %v155
  %v157 = vsel %vm151, %v156, %v155
  %vm158 = vcmp.ne.s32.totalorder %v136, 0
  %vm159 = vcmp.ne.s32.totalorder %v143, 0
  %vm160 = vcmp.ne.s32.totalorder %v150, 0
  %vm161 = vcmp.ne.s32.totalorder %v157, 0
  %vm162 = vcmp.lt.s32.totalorder %v136, 0
  %vm163 = vcmp.lt.s32.totalorder %v143, 0
  %vm164 = vcmp.lt.s32.totalorder %v150, 0
  %vm165 = vcmp.lt.s32.totalorder %v157, 0
  %vm166 = vmand %vm162, %vm158
  %vm167 = vmand %vm163, %vm159
  %vm168 = vmand %vm164, %vm160
  %vm169 = vmand %vm165, %vm161
  %v170 = vadd.s32 %v136, 16
  %v171 = vadd.s32 %v143, 16
  %v172 = vadd.s32 %v150, 16
  %v173 = vadd.s32 %v157, 16
  %v174 = vsel %vm166, %v170, %v136
  %v175 = vsel %vm167, %v171, %v143
  %v176 = vsel %vm168, %v172, %v150
  %v177 = vsel %vm169, %v173, %v157
  %vm178 = vcmp.eq.s32.totalorder %v174, 0
  %vm179 = vcmp.eq.s32.totalorder %v175, 0
  %vm180 = vcmp.eq.s32.totalorder %v176, 0
  %vm181 = vcmp.eq.s32.totalorder %v177, 0
  %v182 = vrot.slane %v121, 7
  %v183 = vrot.slane %v122, 7
  %v184 = vrot.slane %v123, 7
  %v185 = vrot.slane %v124, 7
  %vm186 = vcmp.lt.s32.totalorder %v126, 1
  %v187 = vsel %vm186, %v184, %v185
  %v188 = vsel %vm186, %v183, %v184
  %v189 = vsel %vm186, %v182, %v183
  %v190 = vsel %vm186, %v185, %v182
  %v191 = vsel %vm178, 0.0, %v190
  %v192 = vsel %vm179, 0.0, %v189
  %v193 = vsel %vm180, 0.0, %v188
  %v194 = vsel %vm181, 0.0, %v187
  %vm195 = vcmp.eq.s32.totalorder %v174, 15
  %vm196 = vcmp.eq.s32.totalorder %v175, 15
  %vm197 = vcmp.eq.s32.totalorder %v176, 15
  %vm198 = vcmp.eq.s32.totalorder %v177, 15
  %v199 = vrot.slane %v121, 1
  %v200 = vrot.slane %v122, 1
  %v201 = vrot.slane %v123, 1
  %v202 = vrot.slane %v124, 1
  %vm203 = vcmp.lt.s32.totalorder %v126, 7
  %v204 = vsel %vm203, %v201, %v202
  %v205 = vsel %vm203, %v200, %v201
  %v206 = vsel %vm203, %v199, %v200
  %v207 = vsel %vm203, %v202, %v199
  %v208 = vsel %vm195, 0.0, %v206
  %v209 = vsel %vm196, 0.0, %v205
  %v210 = vsel %vm197, 0.0, %v204
  %v211 = vsel %vm198, 0.0, %v207
  %v212 = vpack.c.bf16 %v192, %v191
  %v213 = vpack.c.bf16 %v122, %v121
  %v214 = vpack.c.bf16 %v209, %v208
  %v215 = vpack.c.bf16 %v194, %v193
  %v216 = vpack.c.bf16 %v124, %v123
  %v217 = vpack.c.bf16 %v211, %v210
  %v218 = vld [vmem:[%s3] sm:$0xf]
  %v219 = vld [vmem:[%s3 + $0x4] sm:$0xf]
  %v220 = vld [vmem:[%s3 + $0x8] sm:$0xf]
  %v221 = vld [vmem:[%s3 + $0xc] sm:$0xf]
  %v222 = vld [vmem:[%s3 + $0x10] sm:$0xf]
  %v223 = vld [vmem:[%s3 + $0x14] sm:$0xf]
  %v224 = vld [vmem:[%s3 + $0x18] sm:$0xf]
  %v225 = vld [vmem:[%s3 + $0x1c] sm:$0xf]
  %v226 = vld [vmem:[%s3 + $0x20] sm:$0xf]
  %v227 = vld [vmem:[%s3 + $0x24] sm:$0xf]
  %v228 = vld [vmem:[%s3 + $0x28] sm:$0xf]
  %v229 = vld [vmem:[%s3 + $0x2c] sm:$0xf]
  %v230 = vld [vmem:[%s3 + $0x30] sm:$0xf]
  %v231 = vld [vmem:[%s3 + $0x34] sm:$0xf]
  %v232 = vld [vmem:[%s3 + $0x38] sm:$0xf]
  %v233 = vld [vmem:[%s3 + $0x3c] sm:$0xf]
  %v234 = vld [vmem:[%s3 + $0x40] sm:$0xf]
  %v235 = vld [vmem:[%s3 + $0x44] sm:$0xf]
  %v236 = vld [vmem:[%s3 + $0x48] sm:$0xf]
  %v237 = vld [vmem:[%s3 + $0x4c] sm:$0xf]
  %v238 = vld [vmem:[%s3 + $0x50] sm:$0xf]
  %v239 = vld [vmem:[%s3 + $0x54] sm:$0xf]
  %v240 = vld [vmem:[%s3 + $0x58] sm:$0xf]
  %v241 = vld [vmem:[%s3 + $0x5c] sm:$0xf]
  %v242 = vld [vmem:[%s3 + $0x60] sm:$0xf]
  %v243 = vld [vmem:[%s3 + $0x64] sm:$0xf]
  %v244 = vld [vmem:[%s3 + $0x68] sm:$0xf]
  %v245 = vld [vmem:[%s3 + $0x6c] sm:$0xf]
  %v246 = vld [vmem:[%s3 + $0x70] sm:$0xf]
  %v247 = vld [vmem:[%s3 + $0x74] sm:$0xf]
  %v248 = vld [vmem:[%s3 + $0x78] sm:$0xf]
  %v249 = vld [vmem:[%s3 + $0x7c] sm:$0xf]
  %v250 = vld [vmem:[%s3 + $0x80] sm:$0xf]
  %v251 = vld [vmem:[%s3 + $0x84] sm:$0xf]
  %v252 = vld [vmem:[%s3 + $0x88] sm:$0xf]
  %v253 = vld [vmem:[%s3 + $0x8c] sm:$0xf]
  %v254 = vld [vmem:[%s3 + $0x90] sm:$0xf]
  %v255 = vld [vmem:[%s3 + $0x94] sm:$0xf]
  %v256 = vld [vmem:[%s3 + $0x98] sm:$0xf]
  %v257 = vld [vmem:[%s3 + $0x9c] sm:$0xf]
  %v258 = vld [vmem:[%s3 + $0xa0] sm:$0xf]
  %v259 = vld [vmem:[%s3 + $0xa4] sm:$0xf]
  %v260 = vld [vmem:[%s3 + $0xa8] sm:$0xf]
  %v261 = vld [vmem:[%s3 + $0xac] sm:$0xf]
  %v262 = vld [vmem:[%s3 + $0xb0] sm:$0xf]
  %v263 = vld [vmem:[%s3 + $0xb4] sm:$0xf]
  %v264 = vld [vmem:[%s3 + $0xb8] sm:$0xf]
  %v265 = vld [vmem:[%s3 + $0xbc] sm:$0xf]
  %v266 = vld [vmem:[%s4] sm:$0x1]
  %v268 = vperm.slane %v266, 0
  %v318 = vunpack.c.l.b16 %v218
  %v319 = vunpack.c.l.b16 %v219
  %v320 = vunpack.c.l.b16 %v220
  %v321 = vunpack.c.l.b16 %v221
  %v322 = vunpack.c.l.b16 %v222
  %v323 = vunpack.c.l.b16 %v223
  %v324 = vunpack.c.l.b16 %v224
  %v325 = vunpack.c.l.b16 %v225
  %v326 = vunpack.c.l.b16 %v226
  %v327 = vunpack.c.l.b16 %v227
  %v328 = vunpack.c.l.b16 %v228
  %v329 = vunpack.c.l.b16 %v229
  %v330 = vunpack.c.l.b16 %v230
  %v331 = vunpack.c.l.b16 %v231
  %v332 = vunpack.c.l.b16 %v232
  %v333 = vunpack.c.l.b16 %v233
  %v334 = vunpack.c.l.b16 %v234
  %v335 = vunpack.c.l.b16 %v235
  %v336 = vunpack.c.l.b16 %v236
  %v337 = vunpack.c.l.b16 %v237
  %v338 = vunpack.c.l.b16 %v238
  %v339 = vunpack.c.l.b16 %v239
  %v340 = vunpack.c.l.b16 %v240
  %v341 = vunpack.c.l.b16 %v241
  %v342 = vunpack.c.l.b16 %v242
  %v343 = vunpack.c.l.b16 %v243
  %v344 = vunpack.c.l.b16 %v244
  %v345 = vunpack.c.l.b16 %v245
  %v346 = vunpack.c.l.b16 %v246
  %v347 = vunpack.c.l.b16 %v247
  %v348 = vunpack.c.l.b16 %v248
  %v349 = vunpack.c.l.b16 %v249
  %v350 = vunpack.c.l.b16 %v250
  %v351 = vunpack.c.l.b16 %v251
  %v352 = vunpack.c.l.b16 %v252
  %v353 = vunpack.c.l.b16 %v253
  %v354 = vunpack.c.l.b16 %v254
  %v355 = vunpack.c.l.b16 %v255
  %v356 = vunpack.c.l.b16 %v256
  %v357 = vunpack.c.l.b16 %v257
  %v358 = vunpack.c.l.b16 %v258
  %v359 = vunpack.c.l.b16 %v259
  %v360 = vunpack.c.l.b16 %v260
  %v361 = vunpack.c.l.b16 %v261
  %v362 = vunpack.c.l.b16 %v262
  %v363 = vunpack.c.l.b16 %v263
  %v364 = vunpack.c.l.b16 %v264
  %v365 = vunpack.c.l.b16 %v265
  %v366 = vpack.c.b16 %v319, %v318
  %v367 = vpack.c.b16 %v321, %v320
  %v368 = vpack.c.b16 %v323, %v322
  %v369 = vpack.c.b16 %v325, %v324
  %v370 = vpack.c.b16 %v327, %v326
  %v371 = vpack.c.b16 %v329, %v328
  %v372 = vpack.c.b16 %v331, %v330
  %v373 = vpack.c.b16 %v333, %v332
  %v374 = vpack.c.b16 %v335, %v334
  %v375 = vpack.c.b16 %v337, %v336
  %v376 = vpack.c.b16 %v339, %v338
  %v377 = vpack.c.b16 %v341, %v340
  %v378 = vpack.c.b16 %v343, %v342
  %v379 = vpack.c.b16 %v345, %v344
  %v380 = vpack.c.b16 %v347, %v346
  %v381 = vpack.c.b16 %v349, %v348
  %v382 = vpack.c.b16 %v351, %v350
  %v383 = vpack.c.b16 %v353, %v352
  %v384 = vpack.c.b16 %v355, %v354
  %v385 = vpack.c.b16 %v357, %v356
  %v386 = vpack.c.b16 %v359, %v358
  %v387 = vpack.c.b16 %v361, %v360
  %v388 = vpack.c.b16 %v363, %v362
  %v389 = vpack.c.b16 %v365, %v364
  %414 = vmatpush.bf16.msra.mxu0 %v373
  %415 = vmatpush.bf16.msra.mxu0 %v372
  %416 = vmatpush.bf16.msra.mxu0 %v371
  %417 = vmatpush.bf16.msra.mxu0 %v370
  %418 = vmatpush.bf16.msra.mxu0 %v369
  %419 = vmatpush.bf16.msra.mxu0 %v368
  %420 = vmatpush.bf16.msra.mxu0 %v367
  %421 = vmatpush.bf16.msra.mxu0 %v366
  %422 = vmatmul.bf16.gmra.mxu0 %v212
  %v423 = vpop.f32.mrf.mxu0
  %v424 = vadd.f32 %v268, %v423
  %v425 = vpop.f32.mrf.mxu0
  %v426 = vadd.f32 %v268, %v425
  %427 = vmatmul.bf16.gmra.mxu0 %v215
  %v428 = vpop.f32.mrf.mxu0
  %v429 = vadd.f32 %v268, %v428
  %v430 = vpop.f32.mrf.mxu0
  %v431 = vadd.f32 %v268, %v430
  %432 = vdwg.mxu0
  %433 = vmatpush.bf16.msra.mxu0 %v381
  %434 = vmatpush.bf16.msra.mxu0 %v380
  %435 = vmatpush.bf16.msra.mxu0 %v379
  %436 = vmatpush.bf16.msra.mxu0 %v378
  %437 = vmatpush.bf16.msra.mxu0 %v377
  %438 = vmatpush.bf16.msra.mxu0 %v376
  %439 = vmatpush.bf16.msra.mxu0 %v375
  %440 = vmatpush.bf16.msra.mxu0 %v374
  %441 = vmatmul.bf16.gmra.mxu0 %v213
  %v442 = vpop.f32.mrf.mxu0
  %v443 = vadd.f32 %v424, %v442
  %v444 = vpop.f32.mrf.mxu0
  %v445 = vadd.f32 %v426, %v444
  %446 = vmatmul.bf16.gmra.mxu0 %v216
  %v447 = vpop.f32.mrf.mxu0
  %v448 = vadd.f32 %v429, %v447
  %v449 = vpop.f32.mrf.mxu0
  %v450 = vadd.f32 %v431, %v449
  %451 = vdwg.mxu0
  %452 = vmatpush.bf16.msra.mxu0 %v389
  %453 = vmatpush.bf16.msra.mxu0 %v388
  %454 = vmatpush.bf16.msra.mxu0 %v387
  %455 = vmatpush.bf16.msra.mxu0 %v386
  %456 = vmatpush.bf16.msra.mxu0 %v385
  %457 = vmatpush.bf16.msra.mxu0 %v384
  %458 = vmatpush.bf16.msra.mxu0 %v383
  %459 = vmatpush.bf16.msra.mxu0 %v382
  %460 = vmatmul.bf16.gmra.mxu0 %v214
  %v461 = vpop.f32.mrf.mxu0
  %v462 = vadd.f32 %v443, %v461
  %v463 = vpop.f32.mrf.mxu0
  %v464 = vadd.f32 %v445, %v463
  %465 = vmatmul.bf16.gmra.mxu0 %v217
  %v466 = vpop.f32.mrf.mxu0
  %v467 = vadd.f32 %v448, %v466
  %v468 = vpop.f32.mrf.mxu0
  %v469 = vadd.f32 %v450, %v468
  %470 = vdwg.mxu0
  %vm471 = vcmp.ge.f32.partialorder %v462, 0.0
  %vm472 = vcmp.ge.f32.partialorder %v464, 0.0
  %vm473 = vcmp.ge.f32.partialorder %v467, 0.0
  %vm474 = vcmp.ge.f32.partialorder %v469, 0.0
  %v475 = vmul.f32 %v462, 0.2
  %v476 = vmul.f32 %v464, 0.2
  %v477 = vmul.f32 %v467, 0.2
  %v478 = vmul.f32 %v469, 0.2
  %v479 = vsel %vm471, %v462, %v475
  %v480 = vsel %vm472, %v464, %v476
  %v481 = vsel %vm473, %v467, %v477
  %v482 = vsel %vm474, %v469, %v478
  %v483 = vmul.f32 %v479, 1.4142135
  %v484 = vmul.f32 %v480, 1.4142135
  %v485 = vmul.f32 %v481, 1.4142135
  %v486 = vmul.f32 %v482, 1.4142135
  %v487 = vpack.c.bf16 %v484, %v483
  %v488 = vpack.c.bf16 %v486, %v485
  %v489 = vld [vmem:[%s5] sm:$0xf]
  %v490 = vld [vmem:[%s5 + $0x4] sm:$0xf]
  %v493 = vunpack.c.l.b16 %v489
  %v494 = vunpack.c.l.b16 %v490
  %v495 = vpack.c.b16 %v494, %v493
  %vm496 = vcmask 261120
  %v498 = vsel %vm496, %v495, 0
  %500 = vmatpush.bf16.msra.mxu0 0
  %501 = vmatpush.bf16.msra.mxu0 0
  %502 = vmatpush.bf16.msra.mxu0 0
  %503 = vmatpush.bf16.msra.mxu0 0
  %504 = vmatpush.bf16.msra.mxu0 0
  %505 = vmatpush.bf16.msra.mxu0 0
  %506 = vmatpush.bf16.msra.mxu0 %v488
  %507 = vmatpush.bf16.msra.mxu0 %v487
  %508 = vmatmul.bf16.gmra.mxu0 %v498
  %v509 = vpop.f32.mrf.mxu0
  %v510 = vadd.f32 0.0, %v509
  %v511 = vpop.f32.mrf.mxu0
  %v512 = vadd.f32 0.0, %v511
  %513 = vdwg.mxu0
  %v514 = vld [vmem:[%s6] sm:$0xf]
  %v515 = vld [vmem:[%s6 + $0x4] sm:$0xf]
  %v518 = vunpack.c.l.b16 %v514
  %v519 = vunpack.c.l.b16 %v515
  %v520 = vpack.c.b16 %v519, %v518
  %v522 = vsel %vm496, %v520, 0
  %524 = vmatpush.bf16.msra.mxu0 0
  %525 = vmatpush.bf16.msra.mxu0 0
  %526 = vmatpush.bf16.msra.mxu0 0
  %527 = vmatpush.bf16.msra.mxu0 0
  %528 = vmatpush.bf16.msra.mxu0 0
  %529 = vmatpush.bf16.msra.mxu0 0
  %530 = vmatpush.bf16.msra.mxu0 %v488
  %531 = vmatpush.bf16.msra.mxu0 %v487
  %532 = vmatmul.bf16.gmra.mxu0 %v522
  %v533 = vpop.f32.mrf.mxu0
  %v534 = vadd.f32 0.0, %v533
  %v535 = vpop.f32.mrf.mxu0
  %v536 = vadd.f32 0.0, %v535
  %537 = vdwg.mxu0
  %vm538 = vcmp.lt.s32.totalorder %v126, 0
  %v539 = vsub.s32 0, %v126
  %v540 = vsel %vm538, %v539, %v126
  %v541 = vshrl.u32 %v540, 3
  %v542 = vand.u32 %v540, 7
  %v543 = vsub.s32 0, %v542
  %v544 = vsel %vm538, %v543, %v542
  %vm545 = vcmp.lt.s32.totalorder %v127, 0
  %v546 = vsub.s32 0, %v127
  %v547 = vsel %vm545, %v546, %v127
  %v548 = vshrl.u32 %v547, 3
  %v549 = vand.u32 %v547, 7
  %v550 = vsub.s32 0, %v549
  %v551 = vsel %vm545, %v550, %v549
  %vm552 = vcmp.ne.s32.totalorder %v544, 0
  %vm553 = vcmp.ne.s32.totalorder %v551, 0
  %vm554 = vcmp.lt.s32.totalorder %v544, 0
  %vm555 = vcmp.lt.s32.totalorder %v551, 0
  %vm556 = vmand %vm554, %vm552
  %vm557 = vmand %vm555, %vm553
  %v558 = vadd.s32 %v544, 8
  %v559 = vadd.s32 %v551, 8
  %v560 = vsel %vm556, %v558, %v544
  %v561 = vsel %vm557, %v559, %v551
  %vm562 = vcmp.eq.s32.totalorder %v560, 0
  %vm563 = vcmp.eq.s32.totalorder %v561, 0
  %vm564 = vcmp.eq.s32.totalorder %v560, 7
  %vm565 = vcmp.eq.s32.totalorder %v561, 7
  %v566 = vrot.slane %v510, 7
  %v567 = vrot.slane %v512, 7
  %v568 = vsel %vm186, %v566, %v567
  %v569 = vsel %vm186, %v567, %v566
  %v570 = vsel %vm562, 0.0, %v569
  %v571 = vsel %vm563, 0.0, %v568
  %v572 = vrot.slane %v534, 7
  %v573 = vrot.slane %v536, 7
  %v574 = vsel %vm186, %v572, %v573
  %v575 = vsel %vm186, %v573, %v572
  %v576 = vsel %vm562, 0.0, %v575
  %v577 = vsel %vm563, 0.0, %v574
  %v578 = vrot.slane %v510, 1
  %v579 = vrot.slane %v512, 1
  %v580 = vsel %vm203, %v578, %v579
  %v581 = vsel %vm203, %v579, %v578
  %v582 = vsel %vm564, 0.0, %v580
  %v583 = vsel %vm565, 0.0, %v581
  %v584 = vrot.slane %v534, 1
  %v585 = vrot.slane %v536, 1
  %v586 = vsel %vm203, %v584, %v585
  %v587 = vsel %vm203, %v585, %v584
  %v588 = vsel %vm564, 0.0, %v586
  %v589 = vsel %vm565, 0.0, %v587
  %v590 = vpack.c.bf16 %v571, %v570
  %v591 = vpack.c.bf16 %v577, %v576
  %v592 = vpack.c.bf16 %v512, %v510
  %v593 = vpack.c.bf16 %v536, %v534
  %v594 = vpack.c.bf16 %v583, %v582
  %v595 = vpack.c.bf16 %v589, %v588
  %v596 = vld [vmem:[%s7] sm:$0xf]
  %v597 = vld [vmem:[%s7 + $0x4] sm:$0xf]
  %v598 = vld [vmem:[%s7 + $0x8] sm:$0xf]
  %v599 = vld [vmem:[%s7 + $0xc] sm:$0xf]
  %v600 = vld [vmem:[%s7 + $0x10] sm:$0xf]
  %v601 = vld [vmem:[%s7 + $0x14] sm:$0xf]
  %v602 = vld [vmem:[%s7 + $0x18] sm:$0xf]
  %v603 = vld [vmem:[%s7 + $0x1c] sm:$0xf]
  %v604 = vld [vmem:[%s7 + $0x20] sm:$0xf]
  %v605 = vld [vmem:[%s7 + $0x24] sm:$0xf]
  %v606 = vld [vmem:[%s7 + $0x28] sm:$0xf]
  %v607 = vld [vmem:[%s7 + $0x2c] sm:$0xf]
  %v608 = vld [vmem:[%s7 + $0x30] sm:$0xf]
  %v609 = vld [vmem:[%s7 + $0x34] sm:$0xf]
  %v610 = vld [vmem:[%s7 + $0x38] sm:$0xf]
  %v611 = vld [vmem:[%s7 + $0x3c] sm:$0xf]
  %v612 = vld [vmem:[%s7 + $0x40] sm:$0xf]
  %v613 = vld [vmem:[%s7 + $0x44] sm:$0xf]
  %v614 = vld [vmem:[%s7 + $0x48] sm:$0xf]
  %v615 = vld [vmem:[%s7 + $0x4c] sm:$0xf]
  %v616 = vld [vmem:[%s7 + $0x50] sm:$0xf]
  %v617 = vld [vmem:[%s7 + $0x54] sm:$0xf]
  %v618 = vld [vmem:[%s7 + $0x58] sm:$0xf]
  %v619 = vld [vmem:[%s7 + $0x5c] sm:$0xf]
  %v620 = vld [vmem:[%s7 + $0x60] sm:$0xf]
  %v621 = vld [vmem:[%s7 + $0x64] sm:$0xf]
  %v622 = vld [vmem:[%s7 + $0x68] sm:$0xf]
  %v623 = vld [vmem:[%s7 + $0x6c] sm:$0xf]
  %v624 = vld [vmem:[%s7 + $0x70] sm:$0xf]
  %v625 = vld [vmem:[%s7 + $0x74] sm:$0xf]
  %v626 = vld [vmem:[%s7 + $0x78] sm:$0xf]
  %v627 = vld [vmem:[%s7 + $0x7c] sm:$0xf]
  %v628 = vld [vmem:[%s7 + $0x80] sm:$0xf]
  %v629 = vld [vmem:[%s7 + $0x84] sm:$0xf]
  %v630 = vld [vmem:[%s7 + $0x88] sm:$0xf]
  %v631 = vld [vmem:[%s7 + $0x8c] sm:$0xf]
  %v632 = vld [vmem:[%s7 + $0x90] sm:$0xf]
  %v633 = vld [vmem:[%s7 + $0x94] sm:$0xf]
  %v634 = vld [vmem:[%s7 + $0x98] sm:$0xf]
  %v635 = vld [vmem:[%s7 + $0x9c] sm:$0xf]
  %v636 = vld [vmem:[%s7 + $0xa0] sm:$0xf]
  %v637 = vld [vmem:[%s7 + $0xa4] sm:$0xf]
  %v638 = vld [vmem:[%s7 + $0xa8] sm:$0xf]
  %v639 = vld [vmem:[%s7 + $0xac] sm:$0xf]
  %v640 = vld [vmem:[%s7 + $0xb0] sm:$0xf]
  %v641 = vld [vmem:[%s7 + $0xb4] sm:$0xf]
  %v642 = vld [vmem:[%s7 + $0xb8] sm:$0xf]
  %v643 = vld [vmem:[%s7 + $0xbc] sm:$0xf]
  %v644 = vld [vmem:[%s7 + $0xc0] sm:$0xf]
  %v645 = vld [vmem:[%s7 + $0xc4] sm:$0xf]
  %v646 = vld [vmem:[%s7 + $0xc8] sm:$0xf]
  %v647 = vld [vmem:[%s7 + $0xcc] sm:$0xf]
  %v648 = vld [vmem:[%s7 + $0xd0] sm:$0xf]
  %v649 = vld [vmem:[%s7 + $0xd4] sm:$0xf]
  %v650 = vld [vmem:[%s7 + $0xd8] sm:$0xf]
  %v651 = vld [vmem:[%s7 + $0xdc] sm:$0xf]
  %v652 = vld [vmem:[%s7 + $0xe0] sm:$0xf]
  %v653 = vld [vmem:[%s7 + $0xe4] sm:$0xf]
  %v654 = vld [vmem:[%s7 + $0xe8] sm:$0xf]
  %v655 = vld [vmem:[%s7 + $0xec] sm:$0xf]
  %v656 = vld [vmem:[%s7 + $0xf0] sm:$0xf]
  %v657 = vld [vmem:[%s7 + $0xf4] sm:$0xf]
  %v658 = vld [vmem:[%s7 + $0xf8] sm:$0xf]
  %v659 = vld [vmem:[%s7 + $0xfc] sm:$0xf]
  %v660 = vld [vmem:[%s7 + $0x100] sm:$0xf]
  %v661 = vld [vmem:[%s7 + $0x104] sm:$0xf]
  %v662 = vld [vmem:[%s7 + $0x108] sm:$0xf]
  %v663 = vld [vmem:[%s7 + $0x10c] sm:$0xf]
  %v664 = vld [vmem:[%s7 + $0x110] sm:$0xf]
  %v665 = vld [vmem:[%s7 + $0x114] sm:$0xf]
  %v666 = vld [vmem:[%s7 + $0x118] sm:$0xf]
  %v667 = vld [vmem:[%s7 + $0x11c] sm:$0xf]
  %v668 = vld [vmem:[%s7 + $0x120] sm:$0xf]
  %v669 = vld [vmem:[%s7 + $0x124] sm:$0xf]
  %v670 = vld [vmem:[%s7 + $0x128] sm:$0xf]
  %v671 = vld [vmem:[%s7 + $0x12c] sm:$0xf]
  %v672 = vld [vmem:[%s7 + $0x130] sm:$0xf]
  %v673 = vld [vmem:[%s7 + $0x134] sm:$0xf]
  %v674 = vld [vmem:[%s7 + $0x138] sm:$0xf]
  %v675 = vld [vmem:[%s7 + $0x13c] sm:$0xf]
  %v676 = vld [vmem:[%s7 + $0x140] sm:$0xf]
  %v677 = vld [vmem:[%s7 + $0x144] sm:$0xf]
  %v678 = vld [vmem:[%s7 + $0x148] sm:$0xf]
  %v679 = vld [vmem:[%s7 + $0x14c] sm:$0xf]
  %v680 = vld [vmem:[%s7 + $0x150] sm:$0xf]
  %v681 = vld [vmem:[%s7 + $0x154] sm:$0xf]
  %v682 = vld [vmem:[%s7 + $0x158] sm:$0xf]
  %v683 = vld [vmem:[%s7 + $0x15c] sm:$0xf]
  %v684 = vld [vmem:[%s7 + $0x160] sm:$0xf]
  %v685 = vld [vmem:[%s7 + $0x164] sm:$0xf]
  %v686 = vld [vmem:[%s7 + $0x168] sm:$0xf]
  %v687 = vld [vmem:[%s7 + $0x16c] sm:$0xf]
  %v688 = vld [vmem:[%s7 + $0x170] sm:$0xf]
  %v689 = vld [vmem:[%s7 + $0x174] sm:$0xf]
  %v690 = vld [vmem:[%s7 + $0x178] sm:$0xf]
  %v691 = vld [vmem:[%s7 + $0x17c] sm:$0xf]
  %v692 = vld [vmem:[%s8] sm:$0x1]
  %v694 = vperm.slane %v692, 0
  %v792 = vunpack.c.l.b16 %v596
  %v793 = vunpack.c.l.b16 %v597
  %v794 = vunpack.c.l.b16 %v598
  %v795 = vunpack.c.l.b16 %v599
  %v796 = vunpack.c.l.b16 %v600
  %v797 = vunpack.c.l.b16 %v601
  %v798 = vunpack.c.l.b16 %v602
  %v799 = vunpack.c.l.b16 %v603
  %v800 = vunpack.c.l.b16 %v604
  %v801 = vunpack.c.l.b16 %v605
  %v802 = vunpack.c.l.b16 %v606
  %v803 = vunpack.c.l.b16 %v607
  %v804 = vunpack.c.l.b16 %v608
  %v805 = vunpack.c.l.b16 %v609
  %v806 = vunpack.c.l.b16 %v610
  %v807 = vunpack.c.l.b16 %v611
  %v808 = vunpack.c.l.b16 %v612
  %v809 = vunpack.c.l.b16 %v613
  %v810 = vunpack.c.l.b16 %v614
  %v811 = vunpack.c.l.b16 %v615
  %v812 = vunpack.c.l.b16 %v616
  %v813 = vunpack.c.l.b16 %v617
  %v814 = vunpack.c.l.b16 %v618
  %v815 = vunpack.c.l.b16 %v619
  %v816 = vunpack.c.l.b16 %v620
  %v817 = vunpack.c.l.b16 %v621
  %v818 = vunpack.c.l.b16 %v622
  %v819 = vunpack.c.l.b16 %v623
  %v820 = vunpack.c.l.b16 %v624
  %v821 = vunpack.c.l.b16 %v625
  %v822 = vunpack.c.l.b16 %v626
  %v823 = vunpack.c.l.b16 %v627
  %v824 = vunpack.c.l.b16 %v628
  %v825 = vunpack.c.l.b16 %v629
  %v826 = vunpack.c.l.b16 %v630
  %v827 = vunpack.c.l.b16 %v631
  %v828 = vunpack.c.l.b16 %v632
  %v829 = vunpack.c.l.b16 %v633
  %v830 = vunpack.c.l.b16 %v634
  %v831 = vunpack.c.l.b16 %v635
  %v832 = vunpack.c.l.b16 %v636
  %v833 = vunpack.c.l.b16 %v637
  %v834 = vunpack.c.l.b16 %v638
  %v835 = vunpack.c.l.b16 %v639
  %v836 = vunpack.c.l.b16 %v640
  %v837 = vunpack.c.l.b16 %v641
  %v838 = vunpack.c.l.b16 %v642
  %v839 = vunpack.c.l.b16 %v643
  %v840 = vunpack.c.l.b16 %v644
  %v841 = vunpack.c.l.b16 %v645
  %v842 = vunpack.c.l.b16 %v646
  %v843 = vunpack.c.l.b16 %v647
  %v844 = vunpack.c.l.b16 %v648
  %v845 = vunpack.c.l.b16 %v649
  %v846 = vunpack.c.l.b16 %v650
  %v847 = vunpack.c.l.b16 %v651
  %v848 = vunpack.c.l.b16 %v652
  %v849 = vunpack.c.l.b16 %v653
  %v850 = vunpack.c.l.b16 %v654
  %v851 = vunpack.c.l.b16 %v655
  %v852 = vunpack.c.l.b16 %v656
  %v853 = vunpack.c.l.b16 %v657
  %v854 = vunpack.c.l.b16 %v658
  %v855 = vunpack.c.l.b16 %v659
  %v856 = vunpack.c.l.b16 %v660
  %v857 = vunpack.c.l.b16 %v661
  %v858 = vunpack.c.l.b16 %v662
  %v859 = vunpack.c.l.b16 %v663
  %v860 = vunpack.c.l.b16 %v664
  %v861 = vunpack.c.l.b16 %v665
  %v862 = vunpack.c.l.b16 %v666
  %v863 = vunpack.c.l.b16 %v667
  %v864 = vunpack.c.l.b16 %v668
  %v865 = vunpack.c.l.b16 %v669
  %v866 = vunpack.c.l.b16 %v670
  %v867 = vunpack.c.l.b16 %v671
  %v868 = vunpack.c.l.b16 %v672
  %v869 = vunpack.c.l.b16 %v673
  %v870 = vunpack.c.l.b16 %v674
  %v871 = vunpack.c.l.b16 %v675
  %v872 = vunpack.c.l.b16 %v676
  %v873 = vunpack.c.l.b16 %v677
  %v874 = vunpack.c.l.b16 %v678
  %v875 = vunpack.c.l.b16 %v679
  %v876 = vunpack.c.l.b16 %v680
  %v877 = vunpack.c.l.b16 %v681
  %v878 = vunpack.c.l.b16 %v682
  %v879 = vunpack.c.l.b16 %v683
  %v880 = vunpack.c.l.b16 %v684
  %v881 = vunpack.c.l.b16 %v685
  %v882 = vunpack.c.l.b16 %v686
  %v883 = vunpack.c.l.b16 %v687
  %v884 = vunpack.c.l.b16 %v688
  %v885 = vunpack.c.l.b16 %v689
  %v886 = vunpack.c.l.b16 %v690
  %v887 = vunpack.c.l.b16 %v691
  %v888 = vpack.c.b16 %v793, %v792
  %v889 = vpack.c.b16 %v795, %v794
  %v890 = vpack.c.b16 %v797, %v796
  %v891 = vpack.c.b16 %v799, %v798
  %v892 = vpack.c.b16 %v801, %v800
  %v893 = vpack.c.b16 %v803, %v802
  %v894 = vpack.c.b16 %v805, %v804
  %v895 = vpack.c.b16 %v807, %v806
  %v896 = vpack.c.b16 %v809, %v808
  %v897 = vpack.c.b16 %v811, %v810
  %v898 = vpack.c.b16 %v813, %v812
  %v899 = vpack.c.b16 %v815, %v814
  %v900 = vpack.c.b16 %v817, %v816
  %v901 = vpack.c.b16 %v819, %v818
  %v902 = vpack.c.b16 %v821, %v820
  %v903 = vpack.c.b16 %v823, %v822
  %v904 = vpack.c.b16 %v825, %v824
  %v905 = vpack.c.b16 %v827, %v826
  %v906 = vpack.c.b16 %v829, %v828
  %v907 = vpack.c.b16 %v831, %v830
  %v908 = vpack.c.b16 %v833, %v832
  %v909 = vpack.c.b16 %v835, %v834
  %v910 = vpack.c.b16 %v837, %v836
  %v911 = vpack.c.b16 %v839, %v838
  %v912 = vpack.c.b16 %v841, %v840
  %v913 = vpack.c.b16 %v843, %v842
  %v914 = vpack.c.b16 %v845, %v844
  %v915 = vpack.c.b16 %v847, %v846
  %v916 = vpack.c.b16 %v849, %v848
  %v917 = vpack.c.b16 %v851, %v850
  %v918 = vpack.c.b16 %v853, %v852
  %v919 = vpack.c.b16 %v855, %v854
  %v920 = vpack.c.b16 %v857, %v856
  %v921 = vpack.c.b16 %v859, %v858
  %v922 = vpack.c.b16 %v861, %v860
  %v923 = vpack.c.b16 %v863, %v862
  %v924 = vpack.c.b16 %v865, %v864
  %v925 = vpack.c.b16 %v867, %v866
  %v926 = vpack.c.b16 %v869, %v868
  %v927 = vpack.c.b16 %v871, %v870
  %v928 = vpack.c.b16 %v873, %v872
  %v929 = vpack.c.b16 %v875, %v874
  %v930 = vpack.c.b16 %v877, %v876
  %v931 = vpack.c.b16 %v879, %v878
  %v932 = vpack.c.b16 %v881, %v880
  %v933 = vpack.c.b16 %v883, %v882
  %v934 = vpack.c.b16 %v885, %v884
  %v935 = vpack.c.b16 %v887, %v886
  %984 = vmatpush.bf16.msra.mxu0 %v895
  %985 = vmatpush.bf16.msra.mxu0 %v894
  %986 = vmatpush.bf16.msra.mxu0 %v893
  %987 = vmatpush.bf16.msra.mxu0 %v892
  %988 = vmatpush.bf16.msra.mxu0 %v891
  %989 = vmatpush.bf16.msra.mxu0 %v890
  %990 = vmatpush.bf16.msra.mxu0 %v889
  %991 = vmatpush.bf16.msra.mxu0 %v888
  %992 = vmatmul.bf16.gmra.mxu0 %v590
  %v993 = vpop.f32.mrf.mxu0
  %v994 = vadd.f32 %v694, %v993
  %v995 = vpop.f32.mrf.mxu0
  %v996 = vadd.f32 %v694, %v995
  %997 = vdwg.mxu0
  %998 = vmatpush.bf16.msra.mxu0 %v903
  %999 = vmatpush.bf16.msra.mxu0 %v902
  %1000 = vmatpush.bf16.msra.mxu0 %v901
  %1001 = vmatpush.bf16.msra.mxu0 %v900
  %1002 = vmatpush.bf16.msra.mxu0 %v899
  %1003 = vmatpush.bf16.msra.mxu0 %v898
  %1004 = vmatpush.bf16.msra.mxu0 %v897
  %1005 = vmatpush.bf16.msra.mxu0 %v896
  %1006 = vmatmul.bf16.gmra.mxu0 %v591
  %v1007 = vpop.f32.mrf.mxu0
  %v1008 = vadd.f32 %v994, %v1007
  %v1009 = vpop.f32.mrf.mxu0
  %v1010 = vadd.f32 %v996, %v1009
  %1011 = vdwg.mxu0
  %1012 = vmatpush.bf16.msra.mxu0 %v911
  %1013 = vmatpush.bf16.msra.mxu0 %v910
  %1014 = vmatpush.bf16.msra.mxu0 %v909
  %1015 = vmatpush.bf16.msra.mxu0 %v908
  %1016 = vmatpush.bf16.msra.mxu0 %v907
  %1017 = vmatpush.bf16.msra.mxu0 %v906
  %1018 = vmatpush.bf16.msra.mxu0 %v905
  %1019 = vmatpush.bf16.msra.mxu0 %v904
  %1020 = vmatmul.bf16.gmra.mxu0 %v592
  %v1021 = vpop.f32.mrf.mxu0
  %v1022 = vadd.f32 %v1008, %v1021
  %v1023 = vpop.f32.mrf.mxu0
  %v1024 = vadd.f32 %v1010, %v1023
  %1025 = vdwg.mxu0
  %1026 = vmatpush.bf16.msra.mxu0 %v919
  %1027 = vmatpush.bf16.msra.mxu0 %v918
  %1028 = vmatpush.bf16.msra.mxu0 %v917
  %1029 = vmatpush.bf16.msra.mxu0 %v916
  %1030 = vmatpush.bf16.msra.mxu0 %v915
  %1031 = vmatpush.bf16.msra.mxu0 %v914
  %1032 = vmatpush.bf16.msra.mxu0 %v913
  %1033 = vmatpush.bf16.msra.mxu0 %v912
  %1034 = vmatmul.bf16.gmra.mxu0 %v593
  %v1035 = vpop.f32.mrf.mxu0
  %v1036 = vadd.f32 %v1022, %v1035
  %v1037 = vpop.f32.mrf.mxu0
  %v1038 = vadd.f32 %v1024, %v1037
  %1039 = vdwg.mxu0
  %1040 = vmatpush.bf16.msra.mxu0 %v927
  %1041 = vmatpush.bf16.msra.mxu0 %v926
  %1042 = vmatpush.bf16.msra.mxu0 %v925
  %1043 = vmatpush.bf16.msra.mxu0 %v924
  %1044 = vmatpush.bf16.msra.mxu0 %v923
  %1045 = vmatpush.bf16.msra.mxu0 %v922
  %1046 = vmatpush.bf16.msra.mxu0 %v921
  %1047 = vmatpush.bf16.msra.mxu0 %v920
  %1048 = vmatmul.bf16.gmra.mxu0 %v594
  %v1049 = vpop.f32.mrf.mxu0
  %v1050 = vadd.f32 %v1036, %v1049
  %v1051 = vpop.f32.mrf.mxu0
  %v1052 = vadd.f32 %v1038, %v1051
  %1053 = vdwg.mxu0
  %1054 = vmatpush.bf16.msra.mxu0 %v935
  %1055 = vmatpush.bf16.msra.mxu0 %v934
  %1056 = vmatpush.bf16.msra.mxu0 %v933
  %1057 = vmatpush.bf16.msra.mxu0 %v932
  %1058 = vmatpush.bf16.msra.mxu0 %v931
  %1059 = vmatpush.bf16.msra.mxu0 %v930
  %1060 = vmatpush.bf16.msra.mxu0 %v929
  %1061 = vmatpush.bf16.msra.mxu0 %v928
  %1062 = vmatmul.bf16.gmra.mxu0 %v595
  %v1063 = vpop.f32.mrf.mxu0
  %v1064 = vadd.f32 %v1050, %v1063
  %v1065 = vpop.f32.mrf.mxu0
  %v1066 = vadd.f32 %v1052, %v1065
  %1067 = vdwg.mxu0
  %vm1068 = vcmp.ge.f32.partialorder %v1064, 0.0
  %vm1069 = vcmp.ge.f32.partialorder %v1066, 0.0
  %v1070 = vmul.f32 %v1064, 0.2
  %v1071 = vmul.f32 %v1066, 0.2
  %v1072 = vsel %vm1068, %v1064, %v1070
  %v1073 = vsel %vm1069, %v1066, %v1071
  %v1074 = vmul.f32 %v1072, 1.4142135
  %v1075 = vmul.f32 %v1073, 1.4142135
  %1076 = vst [vmem:[%s11] sm:$0xff] %v1074
  %1077 = vst [vmem:[%s11 + $0x8] sm:$0xff] %v1075
  %v1078 = vld [vmem:[%s9] sm:$0xf]
  %v1079 = vld [vmem:[%s9 + $0x4] sm:$0xf]
  %v1082 = vunpack.c.l.b16 %v1078
  %v1083 = vunpack.c.l.b16 %v1079
  %v1084 = vpack.c.b16 %v1083, %v1082
  %v1088 = vsel %vm496, %v1084, 0
  %1090 = vmatpush.bf16.msra.mxu0 0
  %1091 = vmatpush.bf16.msra.mxu0 0
  %1092 = vmatpush.bf16.msra.mxu0 0
  %1093 = vmatpush.bf16.msra.mxu0 0
  %1094 = vmatpush.bf16.msra.mxu0 0
  %1095 = vmatpush.bf16.msra.mxu0 0
  %1096 = vmatpush.bf16.msra.mxu0 %v64
  %1097 = vmatpush.bf16.msra.mxu0 %v63
  %1098 = vmatmul.bf16.gmra.mxu0 %v1088
  %v1099 = vpop.f32.mrf.mxu0
  %v1100 = vadd.f32 0.0, %v1099
  %v1101 = vpop.f32.mrf.mxu0
  %v1102 = vadd.f32 0.0, %v1101
  %1103 = vdwg.mxu0
  %v1104 = vpack.c.bf16 %v1102, %v1100
  %v1105 = vld [vmem:[%s10] sm:$0xf]
  %v1106 = vld [vmem:[%s10 + $0x4] sm:$0xf]
  %v1107 = vld [vmem:[%s10 + $0x8] sm:$0xf]
  %v1108 = vld [vmem:[%s10 + $0xc] sm:$0xf]
  %v1109 = vld [vmem:[%s10 + $0x10] sm:$0xf]
  %v1110 = vld [vmem:[%s10 + $0x14] sm:$0xf]
  %v1117 = vunpack.c.l.b16 %v1105
  %v1118 = vunpack.c.l.b16 %v1106
  %v1119 = vunpack.c.l.b16 %v1107
  %v1120 = vunpack.c.l.b16 %v1108
  %v1121 = vunpack.c.l.b16 %v1109
  %v1122 = vunpack.c.l.b16 %v1110
  %v1123 = vpack.c.b16 %v1118, %v1117
  %v1124 = vpack.c.b16 %v1120, %v1119
  %v1125 = vpack.c.b16 %v1122, %v1121
  %v1130 = vsel %vm83, %v1104, 0
  %1132 = vmatpush.bf16.msra.mxu0 0
  %1133 = vmatpush.bf16.msra.mxu0 0
  %1134 = vmatpush.bf16.msra.mxu0 0
  %1135 = vmatpush.bf16.msra.mxu0 0
  %1136 = vmatpush.bf16.msra.mxu0 0
  %1137 = vmatpush.bf16.msra.mxu0 %v1125
  %1138 = vmatpush.bf16.msra.mxu0 %v1124
  %1139 = vmatpush.bf16.msra.mxu0 %v1123
  %1140 = vmatmul.bf16.gmra.mxu0 %v1130
  %v1141 = vpop.f32.mrf.mxu0
  %v1142 = vadd.f32 0.0, %v1141
  %v1143 = vpop.f32.mrf.mxu0
  %v1144 = vadd.f32 0.0, %v1143
  %1145 = vdwg.mxu0
  %1146 = vst [vmem:[%s12] sm:$0xff] %v1142
  %1147 = vst [vmem:[%s12 + $0x8] sm:$0xff] %v1144
  // Predicated region
  $region46: #{skip_block_forward.1} parent=0 // pred_check
    _
  $region47: #{skip_block_forward.1} parent=0 // pred_check_branch
    %1149 = sbr.rel (0) target = $region49
  $region48: #{skip_block_forward.1} parent=0 // pred_region
    _
  $region49: #{skip_block_forward.1} parent=0 // pred_fallthru
    _
  // Predicated region
  $region50: #{skip_block_forward.1} parent=0 // pred_check
    _
  $region51: #{skip_block_forward.1} parent=0 // pred_check_branch
    %1151 = sbr.rel (0) target = $region53
  $region52: #{skip_block_forward.1} parent=0 // pred_region
    _
  $region53: #{skip_block_forward.1} parent=0 // pred_fallthru
    _
  // Predicated region
  $region54: #{skip_block_forward.1} parent=0 // pred_check
    _
  $region55: #{skip_block_forward.1} parent=0 // pred_check_branch
    %1153 = sbr.rel (0) target = $region57
  $region56: #{skip_block_forward.1} parent=0 // pred_region
    _
  $region57: #{skip_block_forward.1} parent=0 // pred_fallthru
    _
  // Predicated region
  $region58: #{skip_block_forward.1} parent=0 // pred_check
    _
  $region59: #{skip_block_forward.1} parent=0 // pred_check_branch
    %1155 = sbr.rel (0) target = $region61
  $region60: #{skip_block_forward.1} parent=0 // pred_region
    _
  $region61: #{skip_block_forward.1} parent=0 // pred_fallthru
    _

</llo_original>
